<compile_context>
chip_gen: v6e
topology: v6e:2x2x1
jax: 0.10.0
libtpu: 0.0.40
codegen_flags: <defaults>
</compile_context>

<pallas_src>
import jax
import jax.numpy as jnp
from jax.experimental import pallas as pl
from jax.experimental.pallas import tpu as pltpu

_HIGH = jax.lax.Precision.HIGHEST


def _vmem_caps():
    """Returns (per-TensorCore VMEM capacity bytes, fused-path budget bytes)."""
    cap = 0
    try:
        info = pltpu.get_tpu_info()
        cap = int(getattr(info, "vmem_capacity_bytes", 0) or 0)
    except Exception:
        cap = 0
    kind = ""
    try:
        kind = jax.devices()[0].device_kind.lower()
    except Exception:
        pass
    is_v7 = ("v7" in kind) or ("7x" in kind)
    if cap <= 0:
        cap = (64 << 20) if is_v7 else (128 << 20)
    if is_v7:
        # v7x has 64 MiB per TensorCore; clamp in case the query reports
        # chip-level (2 TC) capacity.
        cap = min(cap, 64 << 20)
    # v5e/v6e (128 MiB/TC, lowest HBM bandwidth) bias harder toward the fused
    # 2x-traffic path; v7x (64 MiB/TC) stays conservative.
    frac = 0.60 if cap >= (100 << 20) else 0.45
    return cap, min(int(frac * cap), 72 << 20)


def _pick_hw_tile(HW, C, itemsize, budget):
    """Spatial tile (lanes) for the two-pass path: multiple of 128, >= 512
    lanes when possible (per-grid-step overhead), largest whose double-buffered
    in+out blocks fit `budget`.  It does NOT have to divide HW (cdiv grid +
    masked edge tile)."""
    if HW <= 640:
        return HW
    per_lane = 4 * C * itemsize            # 2x input + 2x output buffers
    t = (budget // per_lane // 128) * 128
    t = max(t, 512)                        # floor: stay near the HBM roofline
    return HW if t >= HW else int(t)


# ---------------------------------------------------------------------------
# Fused single-pass kernel: one batch element per grid step, whole (C, HW)
# block resident in VMEM (2x HBM traffic).
# ---------------------------------------------------------------------------
def _fused_kernel(x_ref, w1_ref, w2_ref, o_ref):
    x = x_ref[0]                                                    # (C, HW)
    hw = x.shape[-1]
    # Global average pool via MXU ones-matvec with f32 accumulation -> no
    # full-block f32 temporary.
    ssum = jnp.dot(x, jnp.ones((hw, 1), x.dtype),
                   preferred_element_type=jnp.float32, precision=_HIGH)
    mean = ssum * (1.0 / hw)                                        # (C, 1) f32
    # Conv_Squeeze (1x1, no bias) -> ReLU -> Conv_Excitation -> Sigmoid, in f32.
    s = jnp.maximum(
        jnp.dot(w1_ref[...], mean, preferred_element_type=jnp.float32,
                precision=_HIGH), 0.0)                              # (C//2, 1)
    e = jnp.dot(w2_ref[...], s, preferred_element_type=jnp.float32,
                precision=_HIGH)                                    # (C, 1)
    gate = jax.nn.sigmoid(e)                                        # (C, 1) f32
    # Native-dtype gating multiply (no f32 copy of the block); bf16-safe
    # (<= 1 ulp extra error).
    o_ref[0] = x * gate.astype(x.dtype)


def cse_forward(x_nchw, w1, w2, *, force_two_pass=False, vmem_budget_bytes=None):
    """cSE forward.  x_nchw: (N, C, H, W); w1: (C//2, C); w2: (C, C//2).
    Returns NCHW output with the same dtype as x_nchw."""
    N, C, H, W = x_nchw.shape
    HW = H * W
    itemsize = jnp.dtype(x_nchw.dtype).itemsize

    # Native layout: (N, C, HW) -- a free reshape, no transpose.
    x3 = x_nchw.reshape(N, C, HW)
    w1f = w1.astype(jnp.float32)            # (C//2, C)
    w2f = w2.astype(jnp.float32)            # (C, C//2)

    cap, budget = _vmem_caps()
    if vmem_budget_bytes:
        budget = int(vmem_budget_bytes)

    # Double-buffered f32 weights (tiny).
    w_bytes = 2 * (2 * (C // 2) * C) * 4
    # Fused per-step footprint: 2x input + 2x output blocks in the native
    # dtype, the ones vector, weights, and slack for small (C, 1) temps.
    fused_bytes = 4 * C * HW * itemsize + 2 * HW * itemsize + w_bytes + (1 << 20)
    use_fused = (not force_two_pass) and fused_bytes <= budget

    if use_fused:
        # TODO(synk): for N == 1 the single giant block exposes its in/out DMA;
        # a manual emit_pipeline / double-buffered streaming variant (x in
        # pl.ANY, chunked sum accumulation, chunked gated write-out) would
        # overlap DMA with compute for small-batch latency.
        vmem_limit = int(min(0.95 * cap, max(fused_bytes + (4 << 20), 32 << 20)))
        out3 = pl.pallas_call(
            _fused_kernel,
            out_shape=jax.ShapeDtypeStruct((N, C, HW), x_nchw.dtype),
            grid_spec=pltpu.PrefetchScalarGridSpec(
                num_scalar_prefetch=0,
                grid=(N,),
                in_specs=[
                    pl.BlockSpec((1, C, HW), lambda n: (n, 0, 0)),
                    pl.BlockSpec((C // 2, C), lambda n: (0, 0)),
                    pl.BlockSpec((C, C // 2), lambda n: (0, 0)),
                ],
                out_specs=pl.BlockSpec((1, C, HW), lambda n: (n, 0, 0)),
            ),
            compiler_params=pltpu.CompilerParams(
                dimension_semantics=("parallel",),
                vmem_limit_bytes=vmem_limit),
            cost_estimate=pl.CostEstimate(
                flops=3 * N * C * HW + 4 * N * C * (C // 2),
                transcendentals=N * C,
                bytes_accessed=2 * N * C * HW * itemsize),
        )(x3, w1f, w2f)
        return out3.reshape(N, C, H, W)

    # ----------------------- two-pass tiled path ---------------------------
    T = _pick_hw_tile(HW, C, itemsize, budget)
    KT = pl.cdiv(HW, T)                      # total HW tiles (cdiv, may pad)
    P = 1 if KT <= 1 else min(4, KT)         # megacore super-chunks (parallel)
    KT1 = pl.cdiv(KT, P)                     # tiles per super-chunk
    needs_mask = (P * KT1 * T) != HW         # edge / overflow tiles present

    blk = C * T * itemsize
    vmem_limit = int(min(0.95 * cap,
                         max(6 * blk + 2 * w_bytes + (4 << 20), 32 << 20)))

    # ---- pass 1: per-(n, p) partial spatial sums, f32 ----------------------
    def psum_kernel(x_ref, ps_ref):
        p = pl.program_id(1)
        t = pl.program_id(2)
        x = x_ref[0]                                               # (C, T)
        if needs_mask:
            start = (p * KT1 + t) * T
            lane = jax.lax.broadcasted_iota(jnp.int32, (1, T), 1)
            # Invalid lanes (past HW, or overflow tiles past the last real
            # tile) are zeroed so garbage/NaN padding cannot poison the sum.
            x = jnp.where(lane < (HW - start), x, 0)
        part = jnp.dot(x, jnp.ones((T, 1), x.dtype),
                       preferred_element_type=jnp.float32,
                       precision=_HIGH)                            # (C, 1) f32

        @pl.when(t == 0)
        def _():
            ps_ref[0, 0] = part

        @pl.when(t != 0)
        def _():
            ps_ref[0, 0] = ps_ref[0, 0] + part

    def x_map_p1(n, p, t):
        # Clamp trailing (p, t) slots past the last real tile: they re-read the
        # last tile (block index unchanged -> no extra DMA) and are masked to
        # zero in the kernel.
        return (n, 0, jnp.minimum(p * KT1 + t, KT - 1))

    psums = pl.pallas_call(
        psum_kernel,
        out_shape=jax.ShapeDtypeStruct((N, P, C, 1), jnp.float32),
        grid_spec=pltpu.PrefetchScalarGridSpec(
            num_scalar_prefetch=0,
            grid=(N, P, KT1),                 # reduction axis last
            in_specs=[pl.BlockSpec((1, C, T), x_map_p1)],
            out_specs=pl.BlockSpec((1, 1, C, 1), lambda n, p, t: (n, p, 0, 0)),
        ),
        compiler_params=pltpu.CompilerParams(
            dimension_semantics=("parallel", "parallel", "arbitrary"),
            vmem_limit_bytes=vmem_limit),
        cost_estimate=pl.CostEstimate(
            flops=2 * N * C * HW, transcendentals=0,
            bytes_accessed=N * C * HW * itemsize + N * P * C * 4),
    )(x3)

    # ---- pass 2: squeeze/excite gate (re-derived per tile) + multiply ------
    # Re-computing the tiny (C x C//2) matmuls + sigmoid per tile is negligible
    # and removes the plain-JAX gate dispatch / HBM round-trip between passes,
    # while keeping BOTH grid axes parallel (megacore-friendly for batch 1).
    inv_hw = 1.0 / float(HW)

    def scale_kernel(x_ref, ps_ref, w1_ref, w2_ref, o_ref):
        total = ps_ref[0, 0]                                       # (C, 1) f32
        for i in range(1, P):                                      # P <= 4
            total = total + ps_ref[0, i]
        mean = total * inv_hw
        s = jnp.maximum(
            jnp.dot(w1_ref[...], mean, preferred_element_type=jnp.float32,
                    precision=_HIGH), 0.0)                         # (C//2, 1)
        e = jnp.dot(w2_ref[...], s, preferred_element_type=jnp.float32,
                    precision=_HIGH)                               # (C, 1)
        gate = jax.nn.sigmoid(e)                                   # (C, 1) f32
        x = x_ref[0]                                               # (C, T)
        # Native-dtype gating multiply; padded lanes of edge tiles produce
        # garbage that the clipped output store drops.
        o_ref[0] = x * gate.astype(x.dtype)

    out3 = pl.pallas_call(
        scale_kernel,
        out_shape=jax.ShapeDtypeStruct((N, C, HW), x_nchw.dtype),
        grid_spec=pltpu.PrefetchScalarGridSpec(
            num_scalar_prefetch=0,
            grid=(KT, N),                     # HW-tile axis leading, all parallel
            in_specs=[
                pl.BlockSpec((1, C, T), lambda t, n: (n, 0, t)),
                pl.BlockSpec((1, P, C, 1), lambda t, n: (n, 0, 0, 0)),
                pl.BlockSpec((C // 2, C), lambda t, n: (0, 0)),
                pl.BlockSpec((C, C // 2), lambda t, n: (0, 0)),
            ],
            out_specs=pl.BlockSpec((1, C, T), lambda t, n: (n, 0, t)),
        ),
        compiler_params=pltpu.CompilerParams(
            dimension_semantics=("parallel", "parallel"),
            vmem_limit_bytes=vmem_limit),
        cost_estimate=pl.CostEstimate(
            flops=N * C * HW + 4 * N * KT * C * (C // 2),
            transcendentals=N * KT * C,
            bytes_accessed=2 * N * C * HW * itemsize),
    )(x3, psums, w1f, w2f)

    return out3.reshape(N, C, H, W)


def cse_reference(x, w1, w2):
    """Pure-JAX reference mirroring the PyTorch forward (NCHW), f32 math."""
    xf = x.astype(jnp.float32)
    z = jnp.mean(xf, axis=(2, 3), keepdims=True)
    s = jnp.maximum(jnp.einsum("oc,ncij->noij", w1.astype(jnp.float32), z,
                               precision=_HIGH), 0.0)
    e = jnp.einsum("oc,ncij->noij", w2.astype(jnp.float32), s, precision=_HIGH)
    g = jax.nn.sigmoid(e)
    return xf * g


if __name__ == "__main__":
    key = jax.random.PRNGKey(0)
    kx, k1, k2, kx2 = jax.random.split(key, 4)

    # --- small f32 test (fused single-pass path) ----------------------------
    N, C, H, W = 2, 4, 16, 16
    x = jax.random.normal(kx, (N, C, H, W), dtype=jnp.float32)
    b1 = (1.0 / C) ** 0.5
    b2 = (1.0 / (C // 2)) ** 0.5
    w1 = jax.random.uniform(k1, (C // 2, C), jnp.float32, -b1, b1)
    w2 = jax.random.uniform(k2, (C, C // 2), jnp.float32, -b2, b2)

    out = jax.block_until_ready(cse_forward(x, w1, w2))
    ref = cse_reference(x, w1, w2)
    assert out.shape == (N, C, H, W)
    assert jnp.allclose(out, ref, atol=2e-5, rtol=2e-5)

    # --- same data through the two-pass path (single tile, P=1) -------------
    out2 = jax.block_until_ready(cse_forward(x, w1, w2, force_two_pass=True))
    assert jnp.allclose(out2, ref, atol=2e-5, rtol=2e-5)

    # --- bf16 test: HW (48*48=2304) not a multiple of the tile -> exercises
    #     cdiv grid, clamped index_map, masked edge/overflow tiles, P=4 -------
    Nb, Cb, Hb, Wb = 1, 64, 48, 48
    xb = jax.random.normal(kx2, (Nb, Cb, Hb, Wb), dtype=jnp.bfloat16)
    bb1 = (1.0 / Cb) ** 0.5
    bb2 = (1.0 / (Cb // 2)) ** 0.5
    w1b = jax.random.uniform(k1, (Cb // 2, Cb), jnp.float32, -bb1, bb1)
    w2b = jax.random.uniform(k2, (Cb, Cb // 2), jnp.float32, -bb2, bb2)
    outb = jax.block_until_ready(
        cse_forward(xb, w1b, w2b, force_two_pass=True,
                    vmem_budget_bytes=256 * 1024))
    refb = cse_reference(xb, w1b, w2b)
    assert outb.dtype == jnp.bfloat16
    assert jnp.allclose(outb.astype(jnp.float32), refb, atol=2e-2, rtol=2e-2)

    print("KERNEL_OK")
</pallas_src>

<mosaic_0001>
module attributes {stable_mosaic.version = 11 : i64} {
  func.func @_fused_kernel(%arg0: i32, %arg1: memref<1x4x256xf32, #tpu.memory_space<vmem>>, %arg2: memref<2x4xf32, #tpu.memory_space<vmem>>, %arg3: memref<4x2xf32, #tpu.memory_space<vmem>>, %arg4: memref<1x4x256xf32, #tpu.memory_space<vmem>>) attributes {dimension_semantics = [#tpu.dimension_semantics<parallel>], iteration_bounds = array<i64: 2>, scalar_prefetch = 0 : i64, scratch_operands = 0 : i64, tpu.core_type = #tpu.core_type<tc>, window_params = [{transform_indices = @transform_0, window_bounds = array<i64: 1, 4, 256>}, {pipeline_mode = #tpu.pipeline_mode<synchronous>, transform_indices = @transform_1, window_bounds = array<i64: 2, 4>}, {pipeline_mode = #tpu.pipeline_mode<synchronous>, transform_indices = @transform_2, window_bounds = array<i64: 4, 2>}, {transform_indices = @transform_3, window_bounds = array<i64: 1, 4, 256>}]} {
    %c0 = arith.constant 0 : index
    %c0_0 = arith.constant 0 : index
    %c0_1 = arith.constant 0 : index
    %0 = vector.load %arg1[%c0, %c0_0, %c0_1] : memref<1x4x256xf32, #tpu.memory_space<vmem>>, vector<1x4x256xf32>
    %1 = vector.shape_cast %0 : vector<1x4x256xf32> to vector<4x256xf32>
    %cst = arith.constant 1.000000e+00 : f32
    %2 = vector.broadcast %cst : f32 to vector<256x1xf32>
    %cst_2 = arith.constant dense<0.000000e+00> : vector<4x1xf32>
    %3 = tpu.matmul %1, %2, %cst_2 {dimension_numbers = #tpu.dot_dimension_numbers<[1], [0], [0], [1], [0, 0, 1, 1], [], []>, precision = #tpu.contract_precision<fp32>} : vector<4x256xf32>, vector<256x1xf32>, vector<4x1xf32> -> vector<4x1xf32>
    %cst_3 = arith.constant 3.906250e-03 : f32
    %4 = vector.broadcast %cst_3 : f32 to vector<4x1xf32>
    %5 = arith.mulf %3, %4 : vector<4x1xf32>
    %c0_4 = arith.constant 0 : index
    %c0_5 = arith.constant 0 : index
    %6 = vector.load %arg2[%c0_4, %c0_5] : memref<2x4xf32, #tpu.memory_space<vmem>>, vector<2x4xf32>
    %cst_6 = arith.constant dense<0.000000e+00> : vector<2x1xf32>
    %7 = tpu.matmul %6, %5, %cst_6 {dimension_numbers = #tpu.dot_dimension_numbers<[1], [0], [0], [1], [0, 0, 1, 1], [], []>, precision = #tpu.contract_precision<fp32>} : vector<2x4xf32>, vector<4x1xf32>, vector<2x1xf32> -> vector<2x1xf32>
    %cst_7 = arith.constant 0.000000e+00 : f32
    %8 = vector.broadcast %cst_7 : f32 to vector<2x1xf32>
    %9 = arith.maximumf %7, %8 : vector<2x1xf32>
    %c0_8 = arith.constant 0 : index
    %c0_9 = arith.constant 0 : index
    %10 = vector.load %arg3[%c0_8, %c0_9] : memref<4x2xf32, #tpu.memory_space<vmem>>, vector<4x2xf32>
    %cst_10 = arith.constant dense<0.000000e+00> : vector<4x1xf32>
    %11 = tpu.matmul %10, %9, %cst_10 {dimension_numbers = #tpu.dot_dimension_numbers<[1], [0], [0], [1], [0, 0, 1, 1], [], []>, precision = #tpu.contract_precision<fp32>} : vector<4x2xf32>, vector<2x1xf32>, vector<4x1xf32> -> vector<4x1xf32>
    %12 = arith.negf %11 : vector<4x1xf32>
    %13 = math.exp %12 : vector<4x1xf32>
    %cst_11 = arith.constant 1.000000e+00 : f32
    %14 = vector.broadcast %cst_11 : f32 to vector<4x1xf32>
    %15 = arith.addf %14, %13 : vector<4x1xf32>
    %16 = arith.divf %14, %15 : vector<4x1xf32>
    %17 = vector.broadcast %16 : vector<4x1xf32> to vector<4x256xf32>
    %18 = arith.mulf %1, %17 : vector<4x256xf32>
    %c0_12 = arith.constant 0 : index
    %c0_13 = arith.constant 0 : index
    %c0_14 = arith.constant 0 : index
    %19 = vector.load %arg4[%c0_12, %c0_13, %c0_14] : memref<1x4x256xf32, #tpu.memory_space<vmem>>, vector<1x4x256xf32>
    %20 = vector.shape_cast %19 : vector<1x4x256xf32> to vector<4x256xf32>
    %21 = vector.shape_cast %18 : vector<4x256xf32> to vector<1x4x256xf32>
    tpu.vector_store %arg4[%c0_12, %c0_13, %c0_14], %21 {strides = array<i32>} : memref<1x4x256xf32, #tpu.memory_space<vmem>>, vector<1x4x256xf32>,
    return
  }
  func.func @transform_0(%arg0: i32) -> (i32, i32, i32) {
    %c0_i32 = arith.constant 0 : i32
    %c0_i32_0 = arith.constant 0 : i32
    %c0_i32_1 = arith.constant 0 : i32
    return %arg0, %c0_i32, %c0_i32_0 : i32, i32, i32
  }
  func.func @transform_1(%arg0: i32) -> (i32, i32) {
    %c0_i32 = arith.constant 0 : i32
    %c0_i32_0 = arith.constant 0 : i32
    %c0_i32_1 = arith.constant 0 : i32
    return %c0_i32, %c0_i32_0 : i32, i32
  }
  func.func @transform_2(%arg0: i32) -> (i32, i32) {
    %c0_i32 = arith.constant 0 : i32
    %c0_i32_0 = arith.constant 0 : i32
    %c0_i32_1 = arith.constant 0 : i32
    return %c0_i32, %c0_i32_0 : i32, i32
  }
  func.func @transform_3(%arg0: i32) -> (i32, i32, i32) {
    %c0_i32 = arith.constant 0 : i32
    %c0_i32_0 = arith.constant 0 : i32
    %c0_i32_1 = arith.constant 0 : i32
    return %arg0, %c0_i32, %c0_i32_0 : i32, i32, i32
  }
}

</mosaic_0001>

<llo_original>
// kernel: tpu_custom_call.1
$region0: #{tpu_custom_call.1}
  #allocation0 [shape = 'u32[]', space=smem, size = 0x4, offset = 0x4, fixed_abs, tag = 'smem constant byte address 0x4 - core index']
  #allocation1 [shape = 'u32[144,128]{1,0:T(1,128)}', space=vmem, size = 0x12000, scoped, tag = 'internal scratch']
  %s0 = inlined_call_operand.hbm [shape: f32[2,4,256], index: 0, kind: input, shape index: {}]
  %s1 = inlined_call_operand.vmem [shape: f32[2,4], index: 1, kind: input, shape index: {}]
  %s2 = inlined_call_operand.vmem [shape: f32[4,2], index: 2, kind: input, shape index: {}]
  %s3 = inlined_call_operand.hbm [shape: f32[2,4,256], index: 3, kind: output, shape index: {}]
  %s4 = sld [smem:[#allocation0]]
  $region49: #{tpu_custom_call.1} parent=0
    _
  %s6 = ssub.s32 1, %s4
  %s7 = scalar_select 0, %s6, %s4
  $region1: #{tpu_custom_call.1} parent=0
    #allocation2 [shape = 'u8[8192]{0}', space=vmem, size = 0x2000, scoped, tag = 'input window, operand 0']
    #allocation3 [shape = 's32[2]{0}', space=sflag, size = 0x8, scoped, tag = 'scoped memory for tpu_custom_call.1']
    #allocation4 [shape = 's32[2]{0}', space=sflag, size = 0x8, scoped, tag = 'scoped memory for tpu_custom_call.1']
    #allocation5 [shape = 'u8[8192]{0}', space=vmem, size = 0x2000, scoped, tag = 'output window, operand 0']
    %8 = vsyncpa [#allocation3], 0
    %s9 = scalar_lea.sflag [#allocation3], 1
    %10 = vsyncpa %s9, 0
    %11 = vsyncpa [#allocation4], 0
    %s12 = scalar_lea.sflag [#allocation4], 1
    %13 = vsyncpa %s12, 0
    loop: start=0, step=1, limit=4
    $region2: #{tpu_custom_call.1} parent=1 // loop_pre_header
      _
    $region3: #{tpu_custom_call.1} parent=1 // loop_header
      %s15 = sphi 0, %s19
      %p16 = scmp.ge.s32.totalorder %s15, 4
      %s25 = sphi 0, %s27
      %s28 = sphi 0, %s25
      %s29 = sphi 0, %s28
      %s45 = sphi 0, %s29
      %s49 = sphi 0, %s49
      %s51 = sphi 0, %s49
      %s52 = sphi 0, %s51
      %s66 = sphi 0, %s52
      %s70 = sphi 0, %s70
      %s72 = sphi 0, %s70
      %s73 = sphi 0, %s72
      %s87 = sphi 0, %s73
      %s93 = sphi 0, %s95
      %s96 = sphi 0, %s93
      %s97 = sphi 0, %s96
      %s113 = sphi 0, %s97
    $region4: #{tpu_custom_call.1} parent=1 // loop_header_branch
      %18 = sbr.rel (%p16) target = $region8
    $region5: #{tpu_custom_call.1} parent=1 // loop_body
      %s20 = ssub.s32 %s15, 1
      %s21 = ssub.s32 %s15, 2
      %s22 = sadd.s32 %s15, 1
      %s23 = ssub.s32 %s15, %s22
      %p24 = scmp.eq.s32.totalorder %s23, 0
      %s26 = sadd.s32 %s25, 1
      %s27 = scalar_select %p24, %s25, %s26
      %p30 = pneg %p24
      %p31 = scmp.eq.s32.totalorder %s15, 1
      %p32 = por %p30, %p31
      %p33 = scmp.ne.s32.totalorder %s25, %s28
      %p34 = scmp.eq.s32.totalorder %s15, 0
      %p35 = por %p33, %p34
      %p36 = scmp.ne.s32.totalorder %s25, %s28
      %p37 = scmp.eq.s32.totalorder %s20, 1
      %p38 = por %p36, %p37
      %p39 = scmp.ne.s32.totalorder %s28, %s29
      %p40 = scmp.eq.s32.totalorder %s20, 0
      %p41 = por %p39, %p40
      %p42 = scmp.ne.s32.totalorder %s28, %s29
      %p43 = scmp.eq.s32.totalorder %s21, 1
      %p44 = por %p42, %p43
      %p46 = scmp.ne.s32.totalorder %s29, %s45
      %p47 = scmp.eq.s32.totalorder %s21, 0
      %p48 = por %p46, %p47
      %s50 = sadd.s32 %s49, 1
      %p53 = scmp.eq.s32.totalorder %s15, 1
      %p54 = scmp.ne.s32.totalorder %s49, %s51
      %p55 = scmp.eq.s32.totalorder %s15, 0
      %p56 = por %p54, %p55
      %p57 = scmp.ne.s32.totalorder %s49, %s51
      %p58 = scmp.eq.s32.totalorder %s20, 1
      %p59 = por %p57, %p58
      %p60 = scmp.ne.s32.totalorder %s51, %s52
      %p61 = scmp.eq.s32.totalorder %s20, 0
      %p62 = por %p60, %p61
      %p63 = scmp.ne.s32.totalorder %s51, %s52
      %p64 = scmp.eq.s32.totalorder %s21, 1
      %p65 = por %p63, %p64
      %p67 = scmp.ne.s32.totalorder %s52, %s66
      %p68 = scmp.eq.s32.totalorder %s21, 0
      %p69 = por %p67, %p68
      %s71 = sadd.s32 %s70, 1
      %p74 = scmp.eq.s32.totalorder %s15, 1
      %p75 = scmp.ne.s32.totalorder %s70, %s72
      %p76 = scmp.eq.s32.totalorder %s15, 0
      %p77 = por %p75, %p76
      %p78 = scmp.ne.s32.totalorder %s70, %s72
      %p79 = scmp.eq.s32.totalorder %s20, 1
      %p80 = por %p78, %p79
      %p81 = scmp.ne.s32.totalorder %s72, %s73
      %p82 = scmp.eq.s32.totalorder %s20, 0
      %p83 = por %p81, %p82
      %p84 = scmp.ne.s32.totalorder %s72, %s73
      %p85 = scmp.eq.s32.totalorder %s21, 1
      %p86 = por %p84, %p85
      %p88 = scmp.ne.s32.totalorder %s73, %s87
      %p89 = scmp.eq.s32.totalorder %s21, 0
      %p90 = por %p88, %p89
      %s91 = ssub.s32 %s15, %s22
      %p92 = scmp.eq.s32.totalorder %s91, 0
      %s94 = sadd.s32 %s93, 1
      %s95 = scalar_select %p92, %s93, %s94
      %p98 = pneg %p92
      %p99 = scmp.eq.s32.totalorder %s15, 1
      %p100 = por %p98, %p99
      %p101 = scmp.ne.s32.totalorder %s93, %s96
      %p102 = scmp.eq.s32.totalorder %s15, 0
      %p103 = por %p101, %p102
      %p104 = scmp.ne.s32.totalorder %s93, %s96
      %p105 = scmp.eq.s32.totalorder %s20, 1
      %p106 = por %p104, %p105
      %p107 = scmp.ne.s32.totalorder %s96, %s97
      %p108 = scmp.eq.s32.totalorder %s20, 0
      %p109 = por %p107, %p108
      %p110 = scmp.ne.s32.totalorder %s96, %s97
      %p111 = scmp.eq.s32.totalorder %s21, 1
      %p112 = por %p110, %p111
      %p114 = scmp.ne.s32.totalorder %s97, %s113
      %p115 = scmp.eq.s32.totalorder %s21, 0
      %p116 = por %p114, %p115
      %p117 = scmp.le.s32.totalorder 1, %s15
      %p118 = scmp.lt.s32.totalorder %s15, 3
      %p119 = pnand %p117, %p118
      %p120 = pneg %p119
      // Predicated region
      $region9: #{tpu_custom_call.1} parent=5 // pred_check
        _
      $region10: #{tpu_custom_call.1} parent=5 // pred_check_branch
        %122 = sbr.rel (%p119) target = $region12
      $region11: #{tpu_custom_call.1} parent=5 // pred_region
        %s123 = ssub.s32 %s15, 1
        // Predicated region
        $region13: #{tpu_custom_call.1} parent=11 // pred_check
          %p124 = pneg %p62
        $region14: #{tpu_custom_call.1} parent=11 // pred_check_branch
          %126 = sbr.rel (%p124) target = $region16
        $region15: #{tpu_custom_call.1} parent=11 // pred_region
          _
        $region16: #{tpu_custom_call.1} parent=11 // pred_fallthru
          _
        // Predicated region
        $region17: #{tpu_custom_call.1} parent=11 // pred_check
          %p127 = pneg %p83
        $region18: #{tpu_custom_call.1} parent=11 // pred_check_branch
          %129 = sbr.rel (%p127) target = $region20
        $region19: #{tpu_custom_call.1} parent=11 // pred_region
          _
        $region20: #{tpu_custom_call.1} parent=11 // pred_fallthru
          _
      $region12: #{tpu_custom_call.1} parent=5 // pred_fallthru
        _
      %p130 = scmp.lt.s32.totalorder %s15, 2
      // Predicated region
      $region21: #{tpu_custom_call.1} parent=5 // pred_check
        %p131 = pneg %p130
      $region22: #{tpu_custom_call.1} parent=5 // pred_check_branch
        %133 = sbr.rel (%p131) target = $region24
      $region23: #{tpu_custom_call.1} parent=5 // pred_region
        // Predicated region
        $region25: #{tpu_custom_call.1} parent=23 // pred_check
          %p134 = pneg %p35
        $region26: #{tpu_custom_call.1} parent=23 // pred_check_branch
          %136 = sbr.rel (%p134) target = $region28
        $region27: #{tpu_custom_call.1} parent=23 // pred_region
          %s137 = sand.u32 %s25, 1
          %s138 = scalar_lea.sflag [#allocation3], %s137
          %s139 = sand.u32 %s25, 1
          %s140 = smul.addr %s139, 8
          %s141 = scalar_lea.vmem [#allocation2], %s140
          %s143 = ssub.s32 128, 128
          %144 = vsyncadd %s138, %s143
          %s145 = smul.addr %s15, 2
          %s146 = smul.addr %s145, 64
          %s147 = scalar_lea.hbm %s0, %s146
          %s149 = sshll.u32 %s141, 4
          %s150 = int_to_ptr.vmem [resolvable:$true] %s149
          %152 = dma.hbm_to_vmem [thread:$0]  %s147, 128, %s150, %s138
        $region28: #{tpu_custom_call.1} parent=23 // pred_fallthru
          _
      $region24: #{tpu_custom_call.1} parent=5 // pred_fallthru
        _
      %p153 = scmp.le.s32.totalorder 1, %s15
      %p154 = scmp.lt.s32.totalorder %s15, 3
      %p155 = pnand %p153, %p154
      %p156 = pneg %p155
      // Predicated region
      $region29: #{tpu_custom_call.1} parent=5 // pred_check
        _
      $region30: #{tpu_custom_call.1} parent=5 // pred_check_branch
        %158 = sbr.rel (%p155) target = $region32
      $region31: #{tpu_custom_call.1} parent=5 // pred_region
        %s159 = ssub.s32 %s15, 1
        %s160 = sand.u32 %s28, 1
        %s161 = scalar_lea.sflag [#allocation3], %s160
        %s162 = sand.u32 %s28, 1
        %s163 = smul.addr %s162, 8
        %s164 = scalar_lea.vmem [#allocation2], %s163
        // Predicated region
        $region33: #{tpu_custom_call.1} parent=31 // pred_check
          %p165 = pneg %p41
        $region34: #{tpu_custom_call.1} parent=31 // pred_check_branch
          %167 = sbr.rel (%p165) target = $region36
        $region35: #{tpu_custom_call.1} parent=31 // pred_region
          %168 = dma.done %s161, 128
        $region36: #{tpu_custom_call.1} parent=31 // pred_fallthru
          _
        %s169 = sand.u32 %s28, 1
        %s170 = scalar_lea.sflag [#allocation3], %s169
        %s171 = sand.u32 %s28, 1
        %s172 = smul.addr %s171, 8
        %s173 = scalar_lea.vmem [#allocation2], %s172
        %p174 = pneg %p41
        %p175 = pneg %p38
        %p176 = pneg %p62
        %p177 = pneg %p59
        %p178 = pneg %p83
        %p179 = pneg %p80
        %p180 = pneg %p109
        %p181 = pneg %p106
        %s182 = sand.u32 %s96, 1
        %s183 = scalar_lea.sflag [#allocation4], %s182
        %s184 = sand.u32 %s96, 1
        %s185 = smul.addr %s184, 8
        %s186 = scalar_lea.vmem [#allocation5], %s185
        %v187 = vld [vmem:[%s164] sm:$0xff]
        %v189 = vcombine.high %v187, %v187
        %191 = vmatprep.subr.mxu0 0.0
        %192 = vmatpush1.msra.mxu0 1.0
        %193 = vmatprep.subr.mxu0 0.0
        %194 = vmatpush1.msra.mxu0 1.0
        %195 = vmatprep.subr.mxu0 0.0
        %196 = vmatpush1.msra.mxu0 1.0
        %197 = vmatprep.subr.mxu0 0.0
        %198 = vmatpush1.msra.mxu0 1.0
        %199 = vmatprep.subr.mxu0 0.0
        %200 = vmatpush1.msra.mxu0 1.0
        %201 = vmatprep.subr.mxu0 0.0
        %202 = vmatpush1.msra.mxu0 1.0
        %203 = vmatprep.subr.mxu0 0.0
        %204 = vmatpush1.msra.mxu0 1.0
        %205 = vmatprep.subr.mxu0 0.0
        %206 = vmatpush1.msra.mxu0 1.0
        %207 = vmatprep.subr.mxu0 0.0
        %208 = vmatpush1.msra.mxu0 1.0
        %209 = vmatprep.subr.mxu0 0.0
        %210 = vmatpush1.msra.mxu0 1.0
        %211 = vmatprep.subr.mxu0 0.0
        %212 = vmatpush1.msra.mxu0 1.0
        %213 = vmatprep.subr.mxu0 0.0
        %214 = vmatpush1.msra.mxu0 1.0
        %215 = vmatprep.subr.mxu0 0.0
        %216 = vmatpush1.msra.mxu0 1.0
        %217 = vmatprep.subr.mxu0 0.0
        %218 = vmatpush1.msra.mxu0 1.0
        %219 = vmatprep.subr.mxu0 0.0
        %220 = vmatpush1.msra.mxu0 1.0
        %221 = vmatprep.subr.mxu0 0.0
        %222 = vmatpush1.msra.mxu0 1.0
        %223 = vmatprep.subr.mxu0 0.0
        %224 = vmatpush2.msra.mxu0 1.0
        %225 = vmatprep.subr.mxu0 0.0
        %226 = vmatpush2.msra.mxu0 1.0
        %227 = vmatprep.subr.mxu0 0.0
        %228 = vmatpush2.msra.mxu0 1.0
        %229 = vmatprep.subr.mxu0 0.0
        %230 = vmatpush2.msra.mxu0 1.0
        %231 = vmatprep.subr.mxu0 0.0
        %232 = vmatpush2.msra.mxu0 1.0
        %233 = vmatprep.subr.mxu0 0.0
        %234 = vmatpush2.msra.mxu0 1.0
        %235 = vmatprep.subr.mxu0 0.0
        %236 = vmatpush2.msra.mxu0 1.0
        %237 = vmatprep.subr.mxu0 0.0
        %238 = vmatpush2.msra.mxu0 1.0
        %239 = vmatprep.subr.mxu0 0.0
        %240 = vmatpush2.msra.mxu0 1.0
        %241 = vmatprep.subr.mxu0 0.0
        %242 = vmatpush2.msra.mxu0 1.0
        %243 = vmatprep.subr.mxu0 0.0
        %244 = vmatpush2.msra.mxu0 1.0
        %245 = vmatprep.subr.mxu0 0.0
        %246 = vmatpush2.msra.mxu0 1.0
        %247 = vmatprep.subr.mxu0 0.0
        %248 = vmatpush2.msra.mxu0 1.0
        %249 = vmatprep.subr.mxu0 0.0
        %250 = vmatpush2.msra.mxu0 1.0
        %251 = vmatprep.subr.mxu0 0.0
        %252 = vmatpush2.msra.mxu0 1.0
        %253 = vmatprep.subr.mxu0 0.0
        %254 = vmatpush2.msra.mxu0 1.0
        %v255 = vand.u32 %v189, 4294901760
        %v256 = vsub.f32 %v189, %v255
        %v257 = vand.u32 %v256, 4294901760
        %v258 = vsub.f32 %v256, %v257
        %v259 = vand.u32 %v258, 4294901760
        %260 = vmatprep.mubr.f32.mxu0 %v259
        %v261 = vand.u32 %v187, 4294901760
        %v262 = vsub.f32 %v187, %v261
        %v263 = vand.u32 %v262, 4294901760
        %v264 = vsub.f32 %v262, %v263
        %v265 = vand.u32 %v264, 4294901760
        %266 = vmatmul.mubr.f32.gmra.mxu0 %v265
        %v267 = vpop.f32.mrf.mxu0
        %v268 = vadd.f32 0.0, %v267
        %v269 = vpop.f32.mrf.mxu0
        %270 = vdwg.mxu0
        %271 = vmatprep.subr.mxu0 0.0
        %272 = vmatpush1.msra.mxu0 0.0
        %273 = vmatprep.subr.mxu0 0.0
        %274 = vmatpush1.msra.mxu0 0.0
        %275 = vmatprep.subr.mxu0 0.0
        %276 = vmatpush1.msra.mxu0 0.0
        %277 = vmatprep.subr.mxu0 0.0
        %278 = vmatpush1.msra.mxu0 0.0
        %279 = vmatprep.subr.mxu0 0.0
        %280 = vmatpush1.msra.mxu0 0.0
        %281 = vmatprep.subr.mxu0 0.0
        %282 = vmatpush1.msra.mxu0 0.0
        %283 = vmatprep.subr.mxu0 0.0
        %284 = vmatpush1.msra.mxu0 0.0
        %285 = vmatprep.subr.mxu0 0.0
        %286 = vmatpush1.msra.mxu0 0.0
        %287 = vmatprep.subr.mxu0 0.0
        %288 = vmatpush1.msra.mxu0 0.0
        %289 = vmatprep.subr.mxu0 0.0
        %290 = vmatpush1.msra.mxu0 0.0
        %291 = vmatprep.subr.mxu0 0.0
        %292 = vmatpush1.msra.mxu0 0.0
        %293 = vmatprep.subr.mxu0 0.0
        %294 = vmatpush1.msra.mxu0 0.0
        %295 = vmatprep.subr.mxu0 0.0
        %296 = vmatpush1.msra.mxu0 0.0
        %297 = vmatprep.subr.mxu0 0.0
        %298 = vmatpush1.msra.mxu0 0.0
        %299 = vmatprep.subr.mxu0 0.0
        %300 = vmatpush1.msra.mxu0 0.0
        %301 = vmatprep.subr.mxu0 0.0
        %302 = vmatpush1.msra.mxu0 0.0
        %303 = vmatprep.subr.mxu0 0.0
        %304 = vmatpush2.msra.mxu0 0.0
        %305 = vmatprep.subr.mxu0 0.0
        %306 = vmatpush2.msra.mxu0 0.0
        %307 = vmatprep.subr.mxu0 0.0
        %308 = vmatpush2.msra.mxu0 0.0
        %309 = vmatprep.subr.mxu0 0.0
        %310 = vmatpush2.msra.mxu0 0.0
        %311 = vmatprep.subr.mxu0 0.0
        %312 = vmatpush2.msra.mxu0 0.0
        %313 = vmatprep.subr.mxu0 0.0
        %314 = vmatpush2.msra.mxu0 0.0
        %315 = vmatprep.subr.mxu0 0.0
        %316 = vmatpush2.msra.mxu0 0.0
        %317 = vmatprep.subr.mxu0 0.0
        %318 = vmatpush2.msra.mxu0 0.0
        %319 = vmatprep.subr.mxu0 0.0
        %320 = vmatpush2.msra.mxu0 0.0
        %321 = vmatprep.subr.mxu0 0.0
        %322 = vmatpush2.msra.mxu0 0.0
        %323 = vmatprep.subr.mxu0 0.0
        %324 = vmatpush2.msra.mxu0 0.0
        %325 = vmatprep.subr.mxu0 0.0
        %326 = vmatpush2.msra.mxu0 0.0
        %327 = vmatprep.subr.mxu0 0.0
        %328 = vmatpush2.msra.mxu0 0.0
        %329 = vmatprep.subr.mxu0 0.0
        %330 = vmatpush2.msra.mxu0 0.0
        %331 = vmatprep.subr.mxu0 0.0
        %332 = vmatpush2.msra.mxu0 0.0
        %333 = vmatprep.subr.mxu0 0.0
        %334 = vmatpush2.msra.mxu0 0.0
        %v335 = vand.u32 %v189, 4294901760
        %336 = vmatprep.mubr.f32.mxu0 %v335
        %v337 = vand.u32 %v187, 4294901760
        %338 = vmatmul.mubr.f32.gmra.mxu0 %v337
        %v339 = vpop.f32.mrf.mxu0
        %v340 = vadd.f32 %v268, %v339
        %v341 = vpop.f32.mrf.mxu0
        %342 = vdwg.mxu0
        %343 = vmatprep.subr.mxu0 0.0
        %344 = vmatpush1.msra.mxu0 0.0
        %345 = vmatprep.subr.mxu0 0.0
        %346 = vmatpush1.msra.mxu0 0.0
        %347 = vmatprep.subr.mxu0 0.0
        %348 = vmatpush1.msra.mxu0 0.0
        %349 = vmatprep.subr.mxu0 0.0
        %350 = vmatpush1.msra.mxu0 0.0
        %351 = vmatprep.subr.mxu0 0.0
        %352 = vmatpush1.msra.mxu0 0.0
        %353 = vmatprep.subr.mxu0 0.0
        %354 = vmatpush1.msra.mxu0 0.0
        %355 = vmatprep.subr.mxu0 0.0
        %356 = vmatpush1.msra.mxu0 0.0
        %357 = vmatprep.subr.mxu0 0.0
        %358 = vmatpush1.msra.mxu0 0.0
        %359 = vmatprep.subr.mxu0 0.0
        %360 = vmatpush1.msra.mxu0 0.0
        %361 = vmatprep.subr.mxu0 0.0
        %362 = vmatpush1.msra.mxu0 0.0
        %363 = vmatprep.subr.mxu0 0.0
        %364 = vmatpush1.msra.mxu0 0.0
        %365 = vmatprep.subr.mxu0 0.0
        %366 = vmatpush1.msra.mxu0 0.0
        %367 = vmatprep.subr.mxu0 0.0
        %368 = vmatpush1.msra.mxu0 0.0
        %369 = vmatprep.subr.mxu0 0.0
        %370 = vmatpush1.msra.mxu0 0.0
        %371 = vmatprep.subr.mxu0 0.0
        %372 = vmatpush1.msra.mxu0 0.0
        %373 = vmatprep.subr.mxu0 0.0
        %374 = vmatpush1.msra.mxu0 0.0
        %375 = vmatprep.subr.mxu0 0.0
        %376 = vmatpush2.msra.mxu0 0.0
        %377 = vmatprep.subr.mxu0 0.0
        %378 = vmatpush2.msra.mxu0 0.0
        %379 = vmatprep.subr.mxu0 0.0
        %380 = vmatpush2.msra.mxu0 0.0
        %381 = vmatprep.subr.mxu0 0.0
        %382 = vmatpush2.msra.mxu0 0.0
        %383 = vmatprep.subr.mxu0 0.0
        %384 = vmatpush2.msra.mxu0 0.0
        %385 = vmatprep.subr.mxu0 0.0
        %386 = vmatpush2.msra.mxu0 0.0
        %387 = vmatprep.subr.mxu0 0.0
        %388 = vmatpush2.msra.mxu0 0.0
        %389 = vmatprep.subr.mxu0 0.0
        %390 = vmatpush2.msra.mxu0 0.0
        %391 = vmatprep.subr.mxu0 0.0
        %392 = vmatpush2.msra.mxu0 0.0
        %393 = vmatprep.subr.mxu0 0.0
        %394 = vmatpush2.msra.mxu0 0.0
        %395 = vmatprep.subr.mxu0 0.0
        %396 = vmatpush2.msra.mxu0 0.0
        %397 = vmatprep.subr.mxu0 0.0
        %398 = vmatpush2.msra.mxu0 0.0
        %399 = vmatprep.subr.mxu0 0.0
        %400 = vmatpush2.msra.mxu0 0.0
        %401 = vmatprep.subr.mxu0 0.0
        %402 = vmatpush2.msra.mxu0 0.0
        %403 = vmatprep.subr.mxu0 0.0
        %404 = vmatpush2.msra.mxu0 0.0
        %405 = vmatprep.subr.mxu0 0.0
        %406 = vmatpush2.msra.mxu0 0.0
        %v407 = vand.u32 %v189, 4294901760
        %v408 = vsub.f32 %v189, %v407
        %409 = vmatprep.mubr.f32.mxu0 %v408
        %v410 = vand.u32 %v187, 4294901760
        %v411 = vsub.f32 %v187, %v410
        %412 = vmatmul.mubr.f32.gmra.mxu0 %v411
        %v413 = vpop.f32.mrf.mxu0
        %v414 = vadd.f32 %v340, %v413
        %v415 = vpop.f32.mrf.mxu0
        %416 = vdwg.mxu0
        %417 = vmatprep.subr.mxu0 0.0
        %418 = vmatpush1.msra.mxu0 1.0
        %419 = vmatprep.subr.mxu0 0.0
        %420 = vmatpush1.msra.mxu0 1.0
        %421 = vmatprep.subr.mxu0 0.0
        %422 = vmatpush1.msra.mxu0 1.0
        %423 = vmatprep.subr.mxu0 0.0
        %424 = vmatpush1.msra.mxu0 1.0
        %425 = vmatprep.subr.mxu0 0.0
        %426 = vmatpush1.msra.mxu0 1.0
        %427 = vmatprep.subr.mxu0 0.0
        %428 = vmatpush1.msra.mxu0 1.0
        %429 = vmatprep.subr.mxu0 0.0
        %430 = vmatpush1.msra.mxu0 1.0
        %431 = vmatprep.subr.mxu0 0.0
        %432 = vmatpush1.msra.mxu0 1.0
        %433 = vmatprep.subr.mxu0 0.0
        %434 = vmatpush1.msra.mxu0 1.0
        %435 = vmatprep.subr.mxu0 0.0
        %436 = vmatpush1.msra.mxu0 1.0
        %437 = vmatprep.subr.mxu0 0.0
        %438 = vmatpush1.msra.mxu0 1.0
        %439 = vmatprep.subr.mxu0 0.0
        %440 = vmatpush1.msra.mxu0 1.0
        %441 = vmatprep.subr.mxu0 0.0
        %442 = vmatpush1.msra.mxu0 1.0
        %443 = vmatprep.subr.mxu0 0.0
        %444 = vmatpush1.msra.mxu0 1.0
        %445 = vmatprep.subr.mxu0 0.0
        %446 = vmatpush1.msra.mxu0 1.0
        %447 = vmatprep.subr.mxu0 0.0
        %448 = vmatpush1.msra.mxu0 1.0
        %449 = vmatprep.subr.mxu0 0.0
        %450 = vmatpush2.msra.mxu0 1.0
        %451 = vmatprep.subr.mxu0 0.0
        %452 = vmatpush2.msra.mxu0 1.0
        %453 = vmatprep.subr.mxu0 0.0
        %454 = vmatpush2.msra.mxu0 1.0
        %455 = vmatprep.subr.mxu0 0.0
        %456 = vmatpush2.msra.mxu0 1.0
        %457 = vmatprep.subr.mxu0 0.0
        %458 = vmatpush2.msra.mxu0 1.0
        %459 = vmatprep.subr.mxu0 0.0
        %460 = vmatpush2.msra.mxu0 1.0
        %461 = vmatprep.subr.mxu0 0.0
        %462 = vmatpush2.msra.mxu0 1.0
        %463 = vmatprep.subr.mxu0 0.0
        %464 = vmatpush2.msra.mxu0 1.0
        %465 = vmatprep.subr.mxu0 0.0
        %466 = vmatpush2.msra.mxu0 1.0
        %467 = vmatprep.subr.mxu0 0.0
        %468 = vmatpush2.msra.mxu0 1.0
        %469 = vmatprep.subr.mxu0 0.0
        %470 = vmatpush2.msra.mxu0 1.0
        %471 = vmatprep.subr.mxu0 0.0
        %472 = vmatpush2.msra.mxu0 1.0
        %473 = vmatprep.subr.mxu0 0.0
        %474 = vmatpush2.msra.mxu0 1.0
        %475 = vmatprep.subr.mxu0 0.0
        %476 = vmatpush2.msra.mxu0 1.0
        %477 = vmatprep.subr.mxu0 0.0
        %478 = vmatpush2.msra.mxu0 1.0
        %479 = vmatprep.subr.mxu0 0.0
        %480 = vmatpush2.msra.mxu0 1.0
        %v481 = vand.u32 %v189, 4294901760
        %v482 = vsub.f32 %v189, %v481
        %v483 = vand.u32 %v482, 4294901760
        %484 = vmatprep.mubr.f32.mxu0 %v483
        %v485 = vand.u32 %v187, 4294901760
        %v486 = vsub.f32 %v187, %v485
        %v487 = vand.u32 %v486, 4294901760
        %488 = vmatmul.mubr.f32.gmra.mxu0 %v487
        %v489 = vpop.f32.mrf.mxu0
        %v490 = vadd.f32 %v414, %v489
        %v491 = vpop.f32.mrf.mxu0
        %492 = vdwg.mxu0
        %493 = vmatprep.subr.mxu0 0.0
        %494 = vmatpush1.msra.mxu0 0.0
        %495 = vmatprep.subr.mxu0 0.0
        %496 = vmatpush1.msra.mxu0 0.0
        %497 = vmatprep.subr.mxu0 0.0
        %498 = vmatpush1.msra.mxu0 0.0
        %499 = vmatprep.subr.mxu0 0.0
        %500 = vmatpush1.msra.mxu0 0.0
        %501 = vmatprep.subr.mxu0 0.0
        %502 = vmatpush1.msra.mxu0 0.0
        %503 = vmatprep.subr.mxu0 0.0
        %504 = vmatpush1.msra.mxu0 0.0
        %505 = vmatprep.subr.mxu0 0.0
        %506 = vmatpush1.msra.mxu0 0.0
        %507 = vmatprep.subr.mxu0 0.0
        %508 = vmatpush1.msra.mxu0 0.0
        %509 = vmatprep.subr.mxu0 0.0
        %510 = vmatpush1.msra.mxu0 0.0
        %511 = vmatprep.subr.mxu0 0.0
        %512 = vmatpush1.msra.mxu0 0.0
        %513 = vmatprep.subr.mxu0 0.0
        %514 = vmatpush1.msra.mxu0 0.0
        %515 = vmatprep.subr.mxu0 0.0
        %516 = vmatpush1.msra.mxu0 0.0
        %517 = vmatprep.subr.mxu0 0.0
        %518 = vmatpush1.msra.mxu0 0.0
        %519 = vmatprep.subr.mxu0 0.0
        %520 = vmatpush1.msra.mxu0 0.0
        %521 = vmatprep.subr.mxu0 0.0
        %522 = vmatpush1.msra.mxu0 0.0
        %523 = vmatprep.subr.mxu0 0.0
        %524 = vmatpush1.msra.mxu0 0.0
        %525 = vmatprep.subr.mxu0 0.0
        %526 = vmatpush2.msra.mxu0 0.0
        %527 = vmatprep.subr.mxu0 0.0
        %528 = vmatpush2.msra.mxu0 0.0
        %529 = vmatprep.subr.mxu0 0.0
        %530 = vmatpush2.msra.mxu0 0.0
        %531 = vmatprep.subr.mxu0 0.0
        %532 = vmatpush2.msra.mxu0 0.0
        %533 = vmatprep.subr.mxu0 0.0
        %534 = vmatpush2.msra.mxu0 0.0
        %535 = vmatprep.subr.mxu0 0.0
        %536 = vmatpush2.msra.mxu0 0.0
        %537 = vmatprep.subr.mxu0 0.0
        %538 = vmatpush2.msra.mxu0 0.0
        %539 = vmatprep.subr.mxu0 0.0
        %540 = vmatpush2.msra.mxu0 0.0
        %541 = vmatprep.subr.mxu0 0.0
        %542 = vmatpush2.msra.mxu0 0.0
        %543 = vmatprep.subr.mxu0 0.0
        %544 = vmatpush2.msra.mxu0 0.0
        %545 = vmatprep.subr.mxu0 0.0
        %546 = vmatpush2.msra.mxu0 0.0
        %547 = vmatprep.subr.mxu0 0.0
        %548 = vmatpush2.msra.mxu0 0.0
        %549 = vmatprep.subr.mxu0 0.0
        %550 = vmatpush2.msra.mxu0 0.0
        %551 = vmatprep.subr.mxu0 0.0
        %552 = vmatpush2.msra.mxu0 0.0
        %553 = vmatprep.subr.mxu0 0.0
        %554 = vmatpush2.msra.mxu0 0.0
        %555 = vmatprep.subr.mxu0 0.0
        %556 = vmatpush2.msra.mxu0 0.0
        %v557 = vand.u32 %v189, 4294901760
        %558 = vmatprep.mubr.f32.mxu0 %v557
        %v559 = vand.u32 %v187, 4294901760
        %560 = vmatmul.mubr.f32.gmra.mxu0 %v559
        %v561 = vpop.f32.mrf.mxu0
        %v562 = vadd.f32 %v490, %v561
        %v563 = vpop.f32.mrf.mxu0
        %564 = vdwg.mxu0
        %565 = vmatprep.subr.mxu0 0.0
        %566 = vmatpush1.msra.mxu0 1.0
        %567 = vmatprep.subr.mxu0 0.0
        %568 = vmatpush1.msra.mxu0 1.0
        %569 = vmatprep.subr.mxu0 0.0
        %570 = vmatpush1.msra.mxu0 1.0
        %571 = vmatprep.subr.mxu0 0.0
        %572 = vmatpush1.msra.mxu0 1.0
        %573 = vmatprep.subr.mxu0 0.0
        %574 = vmatpush1.msra.mxu0 1.0
        %575 = vmatprep.subr.mxu0 0.0
        %576 = vmatpush1.msra.mxu0 1.0
        %577 = vmatprep.subr.mxu0 0.0
        %578 = vmatpush1.msra.mxu0 1.0
        %579 = vmatprep.subr.mxu0 0.0
        %580 = vmatpush1.msra.mxu0 1.0
        %581 = vmatprep.subr.mxu0 0.0
        %582 = vmatpush1.msra.mxu0 1.0
        %583 = vmatprep.subr.mxu0 0.0
        %584 = vmatpush1.msra.mxu0 1.0
        %585 = vmatprep.subr.mxu0 0.0
        %586 = vmatpush1.msra.mxu0 1.0
        %587 = vmatprep.subr.mxu0 0.0
        %588 = vmatpush1.msra.mxu0 1.0
        %589 = vmatprep.subr.mxu0 0.0
        %590 = vmatpush1.msra.mxu0 1.0
        %591 = vmatprep.subr.mxu0 0.0
        %592 = vmatpush1.msra.mxu0 1.0
        %593 = vmatprep.subr.mxu0 0.0
        %594 = vmatpush1.msra.mxu0 1.0
        %595 = vmatprep.subr.mxu0 0.0
        %596 = vmatpush1.msra.mxu0 1.0
        %597 = vmatprep.subr.mxu0 0.0
        %598 = vmatpush2.msra.mxu0 1.0
        %599 = vmatprep.subr.mxu0 0.0
        %600 = vmatpush2.msra.mxu0 1.0
        %601 = vmatprep.subr.mxu0 0.0
        %602 = vmatpush2.msra.mxu0 1.0
        %603 = vmatprep.subr.mxu0 0.0
        %604 = vmatpush2.msra.mxu0 1.0
        %605 = vmatprep.subr.mxu0 0.0
        %606 = vmatpush2.msra.mxu0 1.0
        %607 = vmatprep.subr.mxu0 0.0
        %608 = vmatpush2.msra.mxu0 1.0
        %609 = vmatprep.subr.mxu0 0.0
        %610 = vmatpush2.msra.mxu0 1.0
        %611 = vmatprep.subr.mxu0 0.0
        %612 = vmatpush2.msra.mxu0 1.0
        %613 = vmatprep.subr.mxu0 0.0
        %614 = vmatpush2.msra.mxu0 1.0
        %615 = vmatprep.subr.mxu0 0.0
        %616 = vmatpush2.msra.mxu0 1.0
        %617 = vmatprep.subr.mxu0 0.0
        %618 = vmatpush2.msra.mxu0 1.0
        %619 = vmatprep.subr.mxu0 0.0
        %620 = vmatpush2.msra.mxu0 1.0
        %621 = vmatprep.subr.mxu0 0.0
        %622 = vmatpush2.msra.mxu0 1.0
        %623 = vmatprep.subr.mxu0 0.0
        %624 = vmatpush2.msra.mxu0 1.0
        %625 = vmatprep.subr.mxu0 0.0
        %626 = vmatpush2.msra.mxu0 1.0
        %627 = vmatprep.subr.mxu0 0.0
        %628 = vmatpush2.msra.mxu0 1.0
        %v629 = vand.u32 %v189, 4294901760
        %630 = vmatprep.mubr.f32.mxu0 %v629
        %v631 = vand.u32 %v187, 4294901760
        %632 = vmatmul.mubr.f32.gmra.mxu0 %v631
        %v633 = vpop.f32.mrf.mxu0
        %v634 = vadd.f32 %v562, %v633
        %v635 = vpop.f32.mrf.mxu0
        %636 = vdwg.mxu0
        %v637 = vmul.f32 %v634, 0.00390625
        %v638 = vld [vmem:[%s1] sm:$0x3]
        %vm639 = vcmask 31744
        %v641 = vsel %vm639, %v638, 0
        %vm643 = vcmask 1043456
        %v645 = vsel %vm643, %v637, 0
        %647 = vmatprep.subr.mxu0 0.0
        %648 = vmatpush1.msra.mxu0 0.0
        %649 = vmatprep.subr.mxu0 0.0
        %650 = vmatpush1.msra.mxu0 0.0
        %651 = vmatprep.subr.mxu0 0.0
        %652 = vmatpush1.msra.mxu0 0.0
        %653 = vmatprep.subr.mxu0 0.0
        %654 = vmatpush1.msra.mxu0 0.0
        %655 = vmatprep.subr.mxu0 0.0
        %656 = vmatpush1.msra.mxu0 0.0
        %657 = vmatprep.subr.mxu0 0.0
        %658 = vmatpush1.msra.mxu0 0.0
        %659 = vmatprep.subr.mxu0 0.0
        %660 = vmatpush1.msra.mxu0 0.0
        %661 = vmatprep.subr.mxu0 0.0
        %662 = vmatpush1.msra.mxu0 0.0
        %663 = vmatprep.subr.mxu0 0.0
        %664 = vmatpush1.msra.mxu0 0.0
        %665 = vmatprep.subr.mxu0 0.0
        %666 = vmatpush1.msra.mxu0 0.0
        %667 = vmatprep.subr.mxu0 0.0
        %668 = vmatpush1.msra.mxu0 0.0
        %669 = vmatprep.subr.mxu0 0.0
        %670 = vmatpush1.msra.mxu0 0.0
        %671 = vmatprep.subr.mxu0 0.0
        %672 = vmatpush1.msra.mxu0 0.0
        %673 = vmatprep.subr.mxu0 0.0
        %674 = vmatpush1.msra.mxu0 0.0
        %675 = vmatprep.subr.mxu0 0.0
        %676 = vmatpush1.msra.mxu0 0.0
        %677 = vmatprep.subr.mxu0 0.0
        %v678 = vand.u32 %v645, 4294901760
        %679 = vmatpush1.msra.mxu0 %v678
        %680 = vmatprep.subr.mxu0 0.0
        %681 = vmatpush2.msra.mxu0 0.0
        %682 = vmatprep.subr.mxu0 0.0
        %683 = vmatpush2.msra.mxu0 0.0
        %684 = vmatprep.subr.mxu0 0.0
        %685 = vmatpush2.msra.mxu0 0.0
        %686 = vmatprep.subr.mxu0 0.0
        %687 = vmatpush2.msra.mxu0 0.0
        %688 = vmatprep.subr.mxu0 0.0
        %689 = vmatpush2.msra.mxu0 0.0
        %690 = vmatprep.subr.mxu0 0.0
        %691 = vmatpush2.msra.mxu0 0.0
        %692 = vmatprep.subr.mxu0 0.0
        %693 = vmatpush2.msra.mxu0 0.0
        %694 = vmatprep.subr.mxu0 0.0
        %695 = vmatpush2.msra.mxu0 0.0
        %696 = vmatprep.subr.mxu0 0.0
        %697 = vmatpush2.msra.mxu0 0.0
        %698 = vmatprep.subr.mxu0 0.0
        %699 = vmatpush2.msra.mxu0 0.0
        %700 = vmatprep.subr.mxu0 0.0
        %701 = vmatpush2.msra.mxu0 0.0
        %702 = vmatprep.subr.mxu0 0.0
        %703 = vmatpush2.msra.mxu0 0.0
        %704 = vmatprep.subr.mxu0 0.0
        %705 = vmatpush2.msra.mxu0 0.0
        %706 = vmatprep.subr.mxu0 0.0
        %707 = vmatpush2.msra.mxu0 0.0
        %708 = vmatprep.subr.mxu0 0.0
        %709 = vmatpush2.msra.mxu0 0.0
        %710 = vmatprep.subr.mxu0 0.0
        %711 = vmatpush2.msra.mxu0 0.0
        %712 = vmatprep.mubr.f32.mxu0 0.0
        %v713 = vand.u32 %v641, 4294901760
        %v714 = vsub.f32 %v641, %v713
        %v715 = vand.u32 %v714, 4294901760
        %v716 = vsub.f32 %v714, %v715
        %v717 = vand.u32 %v716, 4294901760
        %718 = vmatmul.mubr.f32.gmra.mxu0 %v717
        %v719 = vpop.f32.mrf.mxu0
        %v720 = vadd.f32 0.0, %v719
        %v721 = vpop.f32.mrf.mxu0
        %722 = vdwg.mxu0
        %723 = vmatprep.subr.mxu0 0.0
        %724 = vmatpush1.msra.mxu0 0.0
        %725 = vmatprep.subr.mxu0 0.0
        %726 = vmatpush1.msra.mxu0 0.0
        %727 = vmatprep.subr.mxu0 0.0
        %728 = vmatpush1.msra.mxu0 0.0
        %729 = vmatprep.subr.mxu0 0.0
        %730 = vmatpush1.msra.mxu0 0.0
        %731 = vmatprep.subr.mxu0 0.0
        %732 = vmatpush1.msra.mxu0 0.0
        %733 = vmatprep.subr.mxu0 0.0
        %734 = vmatpush1.msra.mxu0 0.0
        %735 = vmatprep.subr.mxu0 0.0
        %736 = vmatpush1.msra.mxu0 0.0
        %737 = vmatprep.subr.mxu0 0.0
        %738 = vmatpush1.msra.mxu0 0.0
        %739 = vmatprep.subr.mxu0 0.0
        %740 = vmatpush1.msra.mxu0 0.0
        %741 = vmatprep.subr.mxu0 0.0
        %742 = vmatpush1.msra.mxu0 0.0
        %743 = vmatprep.subr.mxu0 0.0
        %744 = vmatpush1.msra.mxu0 0.0
        %745 = vmatprep.subr.mxu0 0.0
        %746 = vmatpush1.msra.mxu0 0.0
        %747 = vmatprep.subr.mxu0 0.0
        %748 = vmatpush1.msra.mxu0 0.0
        %749 = vmatprep.subr.mxu0 0.0
        %750 = vmatpush1.msra.mxu0 0.0
        %751 = vmatprep.subr.mxu0 0.0
        %752 = vmatpush1.msra.mxu0 0.0
        %753 = vmatprep.subr.mxu0 0.0
        %v754 = vand.u32 %v645, 4294901760
        %v755 = vsub.f32 %v645, %v754
        %v756 = vand.u32 %v755, 4294901760
        %v757 = vsub.f32 %v755, %v756
        %v758 = vand.u32 %v757, 4294901760
        %759 = vmatpush1.msra.mxu0 %v758
        %760 = vmatprep.subr.mxu0 0.0
        %761 = vmatpush2.msra.mxu0 0.0
        %762 = vmatprep.subr.mxu0 0.0
        %763 = vmatpush2.msra.mxu0 0.0
        %764 = vmatprep.subr.mxu0 0.0
        %765 = vmatpush2.msra.mxu0 0.0
        %766 = vmatprep.subr.mxu0 0.0
        %767 = vmatpush2.msra.mxu0 0.0
        %768 = vmatprep.subr.mxu0 0.0
        %769 = vmatpush2.msra.mxu0 0.0
        %770 = vmatprep.subr.mxu0 0.0
        %771 = vmatpush2.msra.mxu0 0.0
        %772 = vmatprep.subr.mxu0 0.0
        %773 = vmatpush2.msra.mxu0 0.0
        %774 = vmatprep.subr.mxu0 0.0
        %775 = vmatpush2.msra.mxu0 0.0
        %776 = vmatprep.subr.mxu0 0.0
        %777 = vmatpush2.msra.mxu0 0.0
        %778 = vmatprep.subr.mxu0 0.0
        %779 = vmatpush2.msra.mxu0 0.0
        %780 = vmatprep.subr.mxu0 0.0
        %781 = vmatpush2.msra.mxu0 0.0
        %782 = vmatprep.subr.mxu0 0.0
        %783 = vmatpush2.msra.mxu0 0.0
        %784 = vmatprep.subr.mxu0 0.0
        %785 = vmatpush2.msra.mxu0 0.0
        %786 = vmatprep.subr.mxu0 0.0
        %787 = vmatpush2.msra.mxu0 0.0
        %788 = vmatprep.subr.mxu0 0.0
        %789 = vmatpush2.msra.mxu0 0.0
        %790 = vmatprep.subr.mxu0 0.0
        %791 = vmatpush2.msra.mxu0 0.0
        %792 = vmatprep.mubr.f32.mxu0 0.0
        %v793 = vand.u32 %v641, 4294901760
        %794 = vmatmul.mubr.f32.gmra.mxu0 %v793
        %v795 = vpop.f32.mrf.mxu0
        %v796 = vadd.f32 %v720, %v795
        %v797 = vpop.f32.mrf.mxu0
        %798 = vdwg.mxu0
        %799 = vmatprep.subr.mxu0 0.0
        %800 = vmatpush1.msra.mxu0 0.0
        %801 = vmatprep.subr.mxu0 0.0
        %802 = vmatpush1.msra.mxu0 0.0
        %803 = vmatprep.subr.mxu0 0.0
        %804 = vmatpush1.msra.mxu0 0.0
        %805 = vmatprep.subr.mxu0 0.0
        %806 = vmatpush1.msra.mxu0 0.0
        %807 = vmatprep.subr.mxu0 0.0
        %808 = vmatpush1.msra.mxu0 0.0
        %809 = vmatprep.subr.mxu0 0.0
        %810 = vmatpush1.msra.mxu0 0.0
        %811 = vmatprep.subr.mxu0 0.0
        %812 = vmatpush1.msra.mxu0 0.0
        %813 = vmatprep.subr.mxu0 0.0
        %814 = vmatpush1.msra.mxu0 0.0
        %815 = vmatprep.subr.mxu0 0.0
        %816 = vmatpush1.msra.mxu0 0.0
        %817 = vmatprep.subr.mxu0 0.0
        %818 = vmatpush1.msra.mxu0 0.0
        %819 = vmatprep.subr.mxu0 0.0
        %820 = vmatpush1.msra.mxu0 0.0
        %821 = vmatprep.subr.mxu0 0.0
        %822 = vmatpush1.msra.mxu0 0.0
        %823 = vmatprep.subr.mxu0 0.0
        %824 = vmatpush1.msra.mxu0 0.0
        %825 = vmatprep.subr.mxu0 0.0
        %826 = vmatpush1.msra.mxu0 0.0
        %827 = vmatprep.subr.mxu0 0.0
        %828 = vmatpush1.msra.mxu0 0.0
        %829 = vmatprep.subr.mxu0 0.0
        %v830 = vand.u32 %v645, 4294901760
        %v831 = vsub.f32 %v645, %v830
        %832 = vmatpush1.msra.mxu0 %v831
        %833 = vmatprep.subr.mxu0 0.0
        %834 = vmatpush2.msra.mxu0 0.0
        %835 = vmatprep.subr.mxu0 0.0
        %836 = vmatpush2.msra.mxu0 0.0
        %837 = vmatprep.subr.mxu0 0.0
        %838 = vmatpush2.msra.mxu0 0.0
        %839 = vmatprep.subr.mxu0 0.0
        %840 = vmatpush2.msra.mxu0 0.0
        %841 = vmatprep.subr.mxu0 0.0
        %842 = vmatpush2.msra.mxu0 0.0
        %843 = vmatprep.subr.mxu0 0.0
        %844 = vmatpush2.msra.mxu0 0.0
        %845 = vmatprep.subr.mxu0 0.0
        %846 = vmatpush2.msra.mxu0 0.0
        %847 = vmatprep.subr.mxu0 0.0
        %848 = vmatpush2.msra.mxu0 0.0
        %849 = vmatprep.subr.mxu0 0.0
        %850 = vmatpush2.msra.mxu0 0.0
        %851 = vmatprep.subr.mxu0 0.0
        %852 = vmatpush2.msra.mxu0 0.0
        %853 = vmatprep.subr.mxu0 0.0
        %854 = vmatpush2.msra.mxu0 0.0
        %855 = vmatprep.subr.mxu0 0.0
        %856 = vmatpush2.msra.mxu0 0.0
        %857 = vmatprep.subr.mxu0 0.0
        %858 = vmatpush2.msra.mxu0 0.0
        %859 = vmatprep.subr.mxu0 0.0
        %860 = vmatpush2.msra.mxu0 0.0
        %861 = vmatprep.subr.mxu0 0.0
        %862 = vmatpush2.msra.mxu0 0.0
        %863 = vmatprep.subr.mxu0 0.0
        %864 = vmatpush2.msra.mxu0 0.0
        %865 = vmatprep.mubr.f32.mxu0 0.0
        %v866 = vand.u32 %v641, 4294901760
        %v867 = vsub.f32 %v641, %v866
        %868 = vmatmul.mubr.f32.gmra.mxu0 %v867
        %v869 = vpop.f32.mrf.mxu0
        %v870 = vadd.f32 %v796, %v869
        %v871 = vpop.f32.mrf.mxu0
        %872 = vdwg.mxu0
        %873 = vmatprep.subr.mxu0 0.0
        %874 = vmatpush1.msra.mxu0 0.0
        %875 = vmatprep.subr.mxu0 0.0
        %876 = vmatpush1.msra.mxu0 0.0
        %877 = vmatprep.subr.mxu0 0.0
        %878 = vmatpush1.msra.mxu0 0.0
        %879 = vmatprep.subr.mxu0 0.0
        %880 = vmatpush1.msra.mxu0 0.0
        %881 = vmatprep.subr.mxu0 0.0
        %882 = vmatpush1.msra.mxu0 0.0
        %883 = vmatprep.subr.mxu0 0.0
        %884 = vmatpush1.msra.mxu0 0.0
        %885 = vmatprep.subr.mxu0 0.0
        %886 = vmatpush1.msra.mxu0 0.0
        %887 = vmatprep.subr.mxu0 0.0
        %888 = vmatpush1.msra.mxu0 0.0
        %889 = vmatprep.subr.mxu0 0.0
        %890 = vmatpush1.msra.mxu0 0.0
        %891 = vmatprep.subr.mxu0 0.0
        %892 = vmatpush1.msra.mxu0 0.0
        %893 = vmatprep.subr.mxu0 0.0
        %894 = vmatpush1.msra.mxu0 0.0
        %895 = vmatprep.subr.mxu0 0.0
        %896 = vmatpush1.msra.mxu0 0.0
        %897 = vmatprep.subr.mxu0 0.0
        %898 = vmatpush1.msra.mxu0 0.0
        %899 = vmatprep.subr.mxu0 0.0
        %900 = vmatpush1.msra.mxu0 0.0
        %901 = vmatprep.subr.mxu0 0.0
        %902 = vmatpush1.msra.mxu0 0.0
        %903 = vmatprep.subr.mxu0 0.0
        %v904 = vand.u32 %v645, 4294901760
        %905 = vmatpush1.msra.mxu0 %v904
        %906 = vmatprep.subr.mxu0 0.0
        %907 = vmatpush2.msra.mxu0 0.0
        %908 = vmatprep.subr.mxu0 0.0
        %909 = vmatpush2.msra.mxu0 0.0
        %910 = vmatprep.subr.mxu0 0.0
        %911 = vmatpush2.msra.mxu0 0.0
        %912 = vmatprep.subr.mxu0 0.0
        %913 = vmatpush2.msra.mxu0 0.0
        %914 = vmatprep.subr.mxu0 0.0
        %915 = vmatpush2.msra.mxu0 0.0
        %916 = vmatprep.subr.mxu0 0.0
        %917 = vmatpush2.msra.mxu0 0.0
        %918 = vmatprep.subr.mxu0 0.0
        %919 = vmatpush2.msra.mxu0 0.0
        %920 = vmatprep.subr.mxu0 0.0
        %921 = vmatpush2.msra.mxu0 0.0
        %922 = vmatprep.subr.mxu0 0.0
        %923 = vmatpush2.msra.mxu0 0.0
        %924 = vmatprep.subr.mxu0 0.0
        %925 = vmatpush2.msra.mxu0 0.0
        %926 = vmatprep.subr.mxu0 0.0
        %927 = vmatpush2.msra.mxu0 0.0
        %928 = vmatprep.subr.mxu0 0.0
        %929 = vmatpush2.msra.mxu0 0.0
        %930 = vmatprep.subr.mxu0 0.0
        %931 = vmatpush2.msra.mxu0 0.0
        %932 = vmatprep.subr.mxu0 0.0
        %933 = vmatpush2.msra.mxu0 0.0
        %934 = vmatprep.subr.mxu0 0.0
        %935 = vmatpush2.msra.mxu0 0.0
        %936 = vmatprep.subr.mxu0 0.0
        %937 = vmatpush2.msra.mxu0 0.0
        %938 = vmatprep.mubr.f32.mxu0 0.0
        %v939 = vand.u32 %v641, 4294901760
        %v940 = vsub.f32 %v641, %v939
        %v941 = vand.u32 %v940, 4294901760
        %942 = vmatmul.mubr.f32.gmra.mxu0 %v941
        %v943 = vpop.f32.mrf.mxu0
        %v944 = vadd.f32 %v870, %v943
        %v945 = vpop.f32.mrf.mxu0
        %946 = vdwg.mxu0
        %947 = vmatprep.subr.mxu0 0.0
        %948 = vmatpush1.msra.mxu0 0.0
        %949 = vmatprep.subr.mxu0 0.0
        %950 = vmatpush1.msra.mxu0 0.0
        %951 = vmatprep.subr.mxu0 0.0
        %952 = vmatpush1.msra.mxu0 0.0
        %953 = vmatprep.subr.mxu0 0.0
        %954 = vmatpush1.msra.mxu0 0.0
        %955 = vmatprep.subr.mxu0 0.0
        %956 = vmatpush1.msra.mxu0 0.0
        %957 = vmatprep.subr.mxu0 0.0
        %958 = vmatpush1.msra.mxu0 0.0
        %959 = vmatprep.subr.mxu0 0.0
        %960 = vmatpush1.msra.mxu0 0.0
        %961 = vmatprep.subr.mxu0 0.0
        %962 = vmatpush1.msra.mxu0 0.0
        %963 = vmatprep.subr.mxu0 0.0
        %964 = vmatpush1.msra.mxu0 0.0
        %965 = vmatprep.subr.mxu0 0.0
        %966 = vmatpush1.msra.mxu0 0.0
        %967 = vmatprep.subr.mxu0 0.0
        %968 = vmatpush1.msra.mxu0 0.0
        %969 = vmatprep.subr.mxu0 0.0
        %970 = vmatpush1.msra.mxu0 0.0
        %971 = vmatprep.subr.mxu0 0.0
        %972 = vmatpush1.msra.mxu0 0.0
        %973 = vmatprep.subr.mxu0 0.0
        %974 = vmatpush1.msra.mxu0 0.0
        %975 = vmatprep.subr.mxu0 0.0
        %976 = vmatpush1.msra.mxu0 0.0
        %977 = vmatprep.subr.mxu0 0.0
        %v978 = vand.u32 %v645, 4294901760
        %v979 = vsub.f32 %v645, %v978
        %v980 = vand.u32 %v979, 4294901760
        %981 = vmatpush1.msra.mxu0 %v980
        %982 = vmatprep.subr.mxu0 0.0
        %983 = vmatpush2.msra.mxu0 0.0
        %984 = vmatprep.subr.mxu0 0.0
        %985 = vmatpush2.msra.mxu0 0.0
        %986 = vmatprep.subr.mxu0 0.0
        %987 = vmatpush2.msra.mxu0 0.0
        %988 = vmatprep.subr.mxu0 0.0
        %989 = vmatpush2.msra.mxu0 0.0
        %990 = vmatprep.subr.mxu0 0.0
        %991 = vmatpush2.msra.mxu0 0.0
        %992 = vmatprep.subr.mxu0 0.0
        %993 = vmatpush2.msra.mxu0 0.0
        %994 = vmatprep.subr.mxu0 0.0
        %995 = vmatpush2.msra.mxu0 0.0
        %996 = vmatprep.subr.mxu0 0.0
        %997 = vmatpush2.msra.mxu0 0.0
        %998 = vmatprep.subr.mxu0 0.0
        %999 = vmatpush2.msra.mxu0 0.0
        %1000 = vmatprep.subr.mxu0 0.0
        %1001 = vmatpush2.msra.mxu0 0.0
        %1002 = vmatprep.subr.mxu0 0.0
        %1003 = vmatpush2.msra.mxu0 0.0
        %1004 = vmatprep.subr.mxu0 0.0
        %1005 = vmatpush2.msra.mxu0 0.0
        %1006 = vmatprep.subr.mxu0 0.0
        %1007 = vmatpush2.msra.mxu0 0.0
        %1008 = vmatprep.subr.mxu0 0.0
        %1009 = vmatpush2.msra.mxu0 0.0
        %1010 = vmatprep.subr.mxu0 0.0
        %1011 = vmatpush2.msra.mxu0 0.0
        %1012 = vmatprep.subr.mxu0 0.0
        %1013 = vmatpush2.msra.mxu0 0.0
        %1014 = vmatprep.mubr.f32.mxu0 0.0
        %v1015 = vand.u32 %v641, 4294901760
        %1016 = vmatmul.mubr.f32.gmra.mxu0 %v1015
        %v1017 = vpop.f32.mrf.mxu0
        %v1018 = vadd.f32 %v944, %v1017
        %v1019 = vpop.f32.mrf.mxu0
        %1020 = vdwg.mxu0
        %1021 = vmatprep.subr.mxu0 0.0
        %1022 = vmatpush1.msra.mxu0 0.0
        %1023 = vmatprep.subr.mxu0 0.0
        %1024 = vmatpush1.msra.mxu0 0.0
        %1025 = vmatprep.subr.mxu0 0.0
        %1026 = vmatpush1.msra.mxu0 0.0
        %1027 = vmatprep.subr.mxu0 0.0
        %1028 = vmatpush1.msra.mxu0 0.0
        %1029 = vmatprep.subr.mxu0 0.0
        %1030 = vmatpush1.msra.mxu0 0.0
        %1031 = vmatprep.subr.mxu0 0.0
        %1032 = vmatpush1.msra.mxu0 0.0
        %1033 = vmatprep.subr.mxu0 0.0
        %1034 = vmatpush1.msra.mxu0 0.0
        %1035 = vmatprep.subr.mxu0 0.0
        %1036 = vmatpush1.msra.mxu0 0.0
        %1037 = vmatprep.subr.mxu0 0.0
        %1038 = vmatpush1.msra.mxu0 0.0
        %1039 = vmatprep.subr.mxu0 0.0
        %1040 = vmatpush1.msra.mxu0 0.0
        %1041 = vmatprep.subr.mxu0 0.0
        %1042 = vmatpush1.msra.mxu0 0.0
        %1043 = vmatprep.subr.mxu0 0.0
        %1044 = vmatpush1.msra.mxu0 0.0
        %1045 = vmatprep.subr.mxu0 0.0
        %1046 = vmatpush1.msra.mxu0 0.0
        %1047 = vmatprep.subr.mxu0 0.0
        %1048 = vmatpush1.msra.mxu0 0.0
        %1049 = vmatprep.subr.mxu0 0.0
        %1050 = vmatpush1.msra.mxu0 0.0
        %1051 = vmatprep.subr.mxu0 0.0
        %v1052 = vand.u32 %v645, 4294901760
        %1053 = vmatpush1.msra.mxu0 %v1052
        %1054 = vmatprep.subr.mxu0 0.0
        %1055 = vmatpush2.msra.mxu0 0.0
        %1056 = vmatprep.subr.mxu0 0.0
        %1057 = vmatpush2.msra.mxu0 0.0
        %1058 = vmatprep.subr.mxu0 0.0
        %1059 = vmatpush2.msra.mxu0 0.0
        %1060 = vmatprep.subr.mxu0 0.0
        %1061 = vmatpush2.msra.mxu0 0.0
        %1062 = vmatprep.subr.mxu0 0.0
        %1063 = vmatpush2.msra.mxu0 0.0
        %1064 = vmatprep.subr.mxu0 0.0
        %1065 = vmatpush2.msra.mxu0 0.0
        %1066 = vmatprep.subr.mxu0 0.0
        %1067 = vmatpush2.msra.mxu0 0.0
        %1068 = vmatprep.subr.mxu0 0.0
        %1069 = vmatpush2.msra.mxu0 0.0
        %1070 = vmatprep.subr.mxu0 0.0
        %1071 = vmatpush2.msra.mxu0 0.0
        %1072 = vmatprep.subr.mxu0 0.0
        %1073 = vmatpush2.msra.mxu0 0.0
        %1074 = vmatprep.subr.mxu0 0.0
        %1075 = vmatpush2.msra.mxu0 0.0
        %1076 = vmatprep.subr.mxu0 0.0
        %1077 = vmatpush2.msra.mxu0 0.0
        %1078 = vmatprep.subr.mxu0 0.0
        %1079 = vmatpush2.msra.mxu0 0.0
        %1080 = vmatprep.subr.mxu0 0.0
        %1081 = vmatpush2.msra.mxu0 0.0
        %1082 = vmatprep.subr.mxu0 0.0
        %1083 = vmatpush2.msra.mxu0 0.0
        %1084 = vmatprep.subr.mxu0 0.0
        %1085 = vmatpush2.msra.mxu0 0.0
        %1086 = vmatprep.mubr.f32.mxu0 0.0
        %v1087 = vand.u32 %v641, 4294901760
        %1088 = vmatmul.mubr.f32.gmra.mxu0 %v1087
        %v1089 = vpop.f32.mrf.mxu0
        %v1090 = vadd.f32 %v1018, %v1089
        %v1091 = vpop.f32.mrf.mxu0
        %1092 = vdwg.mxu0
        %v1093 = vmax.f32 %v1090, 0.0
        %v1094 = vld [vmem:[%s2] sm:$0xf]
        %vm1095 = vcmask 15360
        %v1097 = vsel %vm1095, %v1094, 0
        %vm1099 = vcmask 1041408
        %v1101 = vsel %vm1099, %v1093, 0
        %1103 = vmatprep.subr.mxu0 0.0
        %1104 = vmatpush1.msra.mxu0 0.0
        %1105 = vmatprep.subr.mxu0 0.0
        %1106 = vmatpush1.msra.mxu0 0.0
        %1107 = vmatprep.subr.mxu0 0.0
        %1108 = vmatpush1.msra.mxu0 0.0
        %1109 = vmatprep.subr.mxu0 0.0
        %1110 = vmatpush1.msra.mxu0 0.0
        %1111 = vmatprep.subr.mxu0 0.0
        %1112 = vmatpush1.msra.mxu0 0.0
        %1113 = vmatprep.subr.mxu0 0.0
        %1114 = vmatpush1.msra.mxu0 0.0
        %1115 = vmatprep.subr.mxu0 0.0
        %1116 = vmatpush1.msra.mxu0 0.0
        %1117 = vmatprep.subr.mxu0 0.0
        %1118 = vmatpush1.msra.mxu0 0.0
        %1119 = vmatprep.subr.mxu0 0.0
        %1120 = vmatpush1.msra.mxu0 0.0
        %1121 = vmatprep.subr.mxu0 0.0
        %1122 = vmatpush1.msra.mxu0 0.0
        %1123 = vmatprep.subr.mxu0 0.0
        %1124 = vmatpush1.msra.mxu0 0.0
        %1125 = vmatprep.subr.mxu0 0.0
        %1126 = vmatpush1.msra.mxu0 0.0
        %1127 = vmatprep.subr.mxu0 0.0
        %1128 = vmatpush1.msra.mxu0 0.0
        %1129 = vmatprep.subr.mxu0 0.0
        %1130 = vmatpush1.msra.mxu0 0.0
        %1131 = vmatprep.subr.mxu0 0.0
        %1132 = vmatpush1.msra.mxu0 0.0
        %1133 = vmatprep.subr.mxu0 0.0
        %v1134 = vand.u32 %v1101, 4294901760
        %1135 = vmatpush1.msra.mxu0 %v1134
        %1136 = vmatprep.subr.mxu0 0.0
        %1137 = vmatpush2.msra.mxu0 0.0
        %1138 = vmatprep.subr.mxu0 0.0
        %1139 = vmatpush2.msra.mxu0 0.0
        %1140 = vmatprep.subr.mxu0 0.0
        %1141 = vmatpush2.msra.mxu0 0.0
        %1142 = vmatprep.subr.mxu0 0.0
        %1143 = vmatpush2.msra.mxu0 0.0
        %1144 = vmatprep.subr.mxu0 0.0
        %1145 = vmatpush2.msra.mxu0 0.0
        %1146 = vmatprep.subr.mxu0 0.0
        %1147 = vmatpush2.msra.mxu0 0.0
        %1148 = vmatprep.subr.mxu0 0.0
        %1149 = vmatpush2.msra.mxu0 0.0
        %1150 = vmatprep.subr.mxu0 0.0
        %1151 = vmatpush2.msra.mxu0 0.0
        %1152 = vmatprep.subr.mxu0 0.0
        %1153 = vmatpush2.msra.mxu0 0.0
        %1154 = vmatprep.subr.mxu0 0.0
        %1155 = vmatpush2.msra.mxu0 0.0
        %1156 = vmatprep.subr.mxu0 0.0
        %1157 = vmatpush2.msra.mxu0 0.0
        %1158 = vmatprep.subr.mxu0 0.0
        %1159 = vmatpush2.msra.mxu0 0.0
        %1160 = vmatprep.subr.mxu0 0.0
        %1161 = vmatpush2.msra.mxu0 0.0
        %1162 = vmatprep.subr.mxu0 0.0
        %1163 = vmatpush2.msra.mxu0 0.0
        %1164 = vmatprep.subr.mxu0 0.0
        %1165 = vmatpush2.msra.mxu0 0.0
        %1166 = vmatprep.subr.mxu0 0.0
        %1167 = vmatpush2.msra.mxu0 0.0
        %1168 = vmatprep.mubr.f32.mxu0 0.0
        %v1169 = vand.u32 %v1097, 4294901760
        %v1170 = vsub.f32 %v1097, %v1169
        %v1171 = vand.u32 %v1170, 4294901760
        %v1172 = vsub.f32 %v1170, %v1171
        %v1173 = vand.u32 %v1172, 4294901760
        %1174 = vmatmul.mubr.f32.gmra.mxu0 %v1173
        %v1175 = vpop.f32.mrf.mxu0
        %v1176 = vadd.f32 0.0, %v1175
        %v1177 = vpop.f32.mrf.mxu0
        %1178 = vdwg.mxu0
        %1179 = vmatprep.subr.mxu0 0.0
        %1180 = vmatpush1.msra.mxu0 0.0
        %1181 = vmatprep.subr.mxu0 0.0
        %1182 = vmatpush1.msra.mxu0 0.0
        %1183 = vmatprep.subr.mxu0 0.0
        %1184 = vmatpush1.msra.mxu0 0.0
        %1185 = vmatprep.subr.mxu0 0.0
        %1186 = vmatpush1.msra.mxu0 0.0
        %1187 = vmatprep.subr.mxu0 0.0
        %1188 = vmatpush1.msra.mxu0 0.0
        %1189 = vmatprep.subr.mxu0 0.0
        %1190 = vmatpush1.msra.mxu0 0.0
        %1191 = vmatprep.subr.mxu0 0.0
        %1192 = vmatpush1.msra.mxu0 0.0
        %1193 = vmatprep.subr.mxu0 0.0
        %1194 = vmatpush1.msra.mxu0 0.0
        %1195 = vmatprep.subr.mxu0 0.0
        %1196 = vmatpush1.msra.mxu0 0.0
        %1197 = vmatprep.subr.mxu0 0.0
        %1198 = vmatpush1.msra.mxu0 0.0
        %1199 = vmatprep.subr.mxu0 0.0
        %1200 = vmatpush1.msra.mxu0 0.0
        %1201 = vmatprep.subr.mxu0 0.0
        %1202 = vmatpush1.msra.mxu0 0.0
        %1203 = vmatprep.subr.mxu0 0.0
        %1204 = vmatpush1.msra.mxu0 0.0
        %1205 = vmatprep.subr.mxu0 0.0
        %1206 = vmatpush1.msra.mxu0 0.0
        %1207 = vmatprep.subr.mxu0 0.0
        %1208 = vmatpush1.msra.mxu0 0.0
        %1209 = vmatprep.subr.mxu0 0.0
        %v1210 = vand.u32 %v1101, 4294901760
        %v1211 = vsub.f32 %v1101, %v1210
        %v1212 = vand.u32 %v1211, 4294901760
        %v1213 = vsub.f32 %v1211, %v1212
        %v1214 = vand.u32 %v1213, 4294901760
        %1215 = vmatpush1.msra.mxu0 %v1214
        %1216 = vmatprep.subr.mxu0 0.0
        %1217 = vmatpush2.msra.mxu0 0.0
        %1218 = vmatprep.subr.mxu0 0.0
        %1219 = vmatpush2.msra.mxu0 0.0
        %1220 = vmatprep.subr.mxu0 0.0
        %1221 = vmatpush2.msra.mxu0 0.0
        %1222 = vmatprep.subr.mxu0 0.0
        %1223 = vmatpush2.msra.mxu0 0.0
        %1224 = vmatprep.subr.mxu0 0.0
        %1225 = vmatpush2.msra.mxu0 0.0
        %1226 = vmatprep.subr.mxu0 0.0
        %1227 = vmatpush2.msra.mxu0 0.0
        %1228 = vmatprep.subr.mxu0 0.0
        %1229 = vmatpush2.msra.mxu0 0.0
        %1230 = vmatprep.subr.mxu0 0.0
        %1231 = vmatpush2.msra.mxu0 0.0
        %1232 = vmatprep.subr.mxu0 0.0
        %1233 = vmatpush2.msra.mxu0 0.0
        %1234 = vmatprep.subr.mxu0 0.0
        %1235 = vmatpush2.msra.mxu0 0.0
        %1236 = vmatprep.subr.mxu0 0.0
        %1237 = vmatpush2.msra.mxu0 0.0
        %1238 = vmatprep.subr.mxu0 0.0
        %1239 = vmatpush2.msra.mxu0 0.0
        %1240 = vmatprep.subr.mxu0 0.0
        %1241 = vmatpush2.msra.mxu0 0.0
        %1242 = vmatprep.subr.mxu0 0.0
        %1243 = vmatpush2.msra.mxu0 0.0
        %1244 = vmatprep.subr.mxu0 0.0
        %1245 = vmatpush2.msra.mxu0 0.0
        %1246 = vmatprep.subr.mxu0 0.0
        %1247 = vmatpush2.msra.mxu0 0.0
        %1248 = vmatprep.mubr.f32.mxu0 0.0
        %v1249 = vand.u32 %v1097, 4294901760
        %1250 = vmatmul.mubr.f32.gmra.mxu0 %v1249
        %v1251 = vpop.f32.mrf.mxu0
        %v1252 = vadd.f32 %v1176, %v1251
        %v1253 = vpop.f32.mrf.mxu0
        %1254 = vdwg.mxu0
        %1255 = vmatprep.subr.mxu0 0.0
        %1256 = vmatpush1.msra.mxu0 0.0
        %1257 = vmatprep.subr.mxu0 0.0
        %1258 = vmatpush1.msra.mxu0 0.0
        %1259 = vmatprep.subr.mxu0 0.0
        %1260 = vmatpush1.msra.mxu0 0.0
        %1261 = vmatprep.subr.mxu0 0.0
        %1262 = vmatpush1.msra.mxu0 0.0
        %1263 = vmatprep.subr.mxu0 0.0
        %1264 = vmatpush1.msra.mxu0 0.0
        %1265 = vmatprep.subr.mxu0 0.0
        %1266 = vmatpush1.msra.mxu0 0.0
        %1267 = vmatprep.subr.mxu0 0.0
        %1268 = vmatpush1.msra.mxu0 0.0
        %1269 = vmatprep.subr.mxu0 0.0
        %1270 = vmatpush1.msra.mxu0 0.0
        %1271 = vmatprep.subr.mxu0 0.0
        %1272 = vmatpush1.msra.mxu0 0.0
        %1273 = vmatprep.subr.mxu0 0.0
        %1274 = vmatpush1.msra.mxu0 0.0
        %1275 = vmatprep.subr.mxu0 0.0
        %1276 = vmatpush1.msra.mxu0 0.0
        %1277 = vmatprep.subr.mxu0 0.0
        %1278 = vmatpush1.msra.mxu0 0.0
        %1279 = vmatprep.subr.mxu0 0.0
        %1280 = vmatpush1.msra.mxu0 0.0
        %1281 = vmatprep.subr.mxu0 0.0
        %1282 = vmatpush1.msra.mxu0 0.0
        %1283 = vmatprep.subr.mxu0 0.0
        %1284 = vmatpush1.msra.mxu0 0.0
        %1285 = vmatprep.subr.mxu0 0.0
        %v1286 = vand.u32 %v1101, 4294901760
        %v1287 = vsub.f32 %v1101, %v1286
        %1288 = vmatpush1.msra.mxu0 %v1287
        %1289 = vmatprep.subr.mxu0 0.0
        %1290 = vmatpush2.msra.mxu0 0.0
        %1291 = vmatprep.subr.mxu0 0.0
        %1292 = vmatpush2.msra.mxu0 0.0
        %1293 = vmatprep.subr.mxu0 0.0
        %1294 = vmatpush2.msra.mxu0 0.0
        %1295 = vmatprep.subr.mxu0 0.0
        %1296 = vmatpush2.msra.mxu0 0.0
        %1297 = vmatprep.subr.mxu0 0.0
        %1298 = vmatpush2.msra.mxu0 0.0
        %1299 = vmatprep.subr.mxu0 0.0
        %1300 = vmatpush2.msra.mxu0 0.0
        %1301 = vmatprep.subr.mxu0 0.0
        %1302 = vmatpush2.msra.mxu0 0.0
        %1303 = vmatprep.subr.mxu0 0.0
        %1304 = vmatpush2.msra.mxu0 0.0
        %1305 = vmatprep.subr.mxu0 0.0
        %1306 = vmatpush2.msra.mxu0 0.0
        %1307 = vmatprep.subr.mxu0 0.0
        %1308 = vmatpush2.msra.mxu0 0.0
        %1309 = vmatprep.subr.mxu0 0.0
        %1310 = vmatpush2.msra.mxu0 0.0
        %1311 = vmatprep.subr.mxu0 0.0
        %1312 = vmatpush2.msra.mxu0 0.0
        %1313 = vmatprep.subr.mxu0 0.0
        %1314 = vmatpush2.msra.mxu0 0.0
        %1315 = vmatprep.subr.mxu0 0.0
        %1316 = vmatpush2.msra.mxu0 0.0
        %1317 = vmatprep.subr.mxu0 0.0
        %1318 = vmatpush2.msra.mxu0 0.0
        %1319 = vmatprep.subr.mxu0 0.0
        %1320 = vmatpush2.msra.mxu0 0.0
        %1321 = vmatprep.mubr.f32.mxu0 0.0
        %v1322 = vand.u32 %v1097, 4294901760
        %v1323 = vsub.f32 %v1097, %v1322
        %1324 = vmatmul.mubr.f32.gmra.mxu0 %v1323
        %v1325 = vpop.f32.mrf.mxu0
        %v1326 = vadd.f32 %v1252, %v1325
        %v1327 = vpop.f32.mrf.mxu0
        %1328 = vdwg.mxu0
        %1329 = vmatprep.subr.mxu0 0.0
        %1330 = vmatpush1.msra.mxu0 0.0
        %1331 = vmatprep.subr.mxu0 0.0
        %1332 = vmatpush1.msra.mxu0 0.0
        %1333 = vmatprep.subr.mxu0 0.0
        %1334 = vmatpush1.msra.mxu0 0.0
        %1335 = vmatprep.subr.mxu0 0.0
        %1336 = vmatpush1.msra.mxu0 0.0
        %1337 = vmatprep.subr.mxu0 0.0
        %1338 = vmatpush1.msra.mxu0 0.0
        %1339 = vmatprep.subr.mxu0 0.0
        %1340 = vmatpush1.msra.mxu0 0.0
        %1341 = vmatprep.subr.mxu0 0.0
        %1342 = vmatpush1.msra.mxu0 0.0
        %1343 = vmatprep.subr.mxu0 0.0
        %1344 = vmatpush1.msra.mxu0 0.0
        %1345 = vmatprep.subr.mxu0 0.0
        %1346 = vmatpush1.msra.mxu0 0.0
        %1347 = vmatprep.subr.mxu0 0.0
        %1348 = vmatpush1.msra.mxu0 0.0
        %1349 = vmatprep.subr.mxu0 0.0
        %1350 = vmatpush1.msra.mxu0 0.0
        %1351 = vmatprep.subr.mxu0 0.0
        %1352 = vmatpush1.msra.mxu0 0.0
        %1353 = vmatprep.subr.mxu0 0.0
        %1354 = vmatpush1.msra.mxu0 0.0
        %1355 = vmatprep.subr.mxu0 0.0
        %1356 = vmatpush1.msra.mxu0 0.0
        %1357 = vmatprep.subr.mxu0 0.0
        %1358 = vmatpush1.msra.mxu0 0.0
        %1359 = vmatprep.subr.mxu0 0.0
        %v1360 = vand.u32 %v1101, 4294901760
        %1361 = vmatpush1.msra.mxu0 %v1360
        %1362 = vmatprep.subr.mxu0 0.0
        %1363 = vmatpush2.msra.mxu0 0.0
        %1364 = vmatprep.subr.mxu0 0.0
        %1365 = vmatpush2.msra.mxu0 0.0
        %1366 = vmatprep.subr.mxu0 0.0
        %1367 = vmatpush2.msra.mxu0 0.0
        %1368 = vmatprep.subr.mxu0 0.0
        %1369 = vmatpush2.msra.mxu0 0.0
        %1370 = vmatprep.subr.mxu0 0.0
        %1371 = vmatpush2.msra.mxu0 0.0
        %1372 = vmatprep.subr.mxu0 0.0
        %1373 = vmatpush2.msra.mxu0 0.0
        %1374 = vmatprep.subr.mxu0 0.0
        %1375 = vmatpush2.msra.mxu0 0.0
        %1376 = vmatprep.subr.mxu0 0.0
        %1377 = vmatpush2.msra.mxu0 0.0
        %1378 = vmatprep.subr.mxu0 0.0
        %1379 = vmatpush2.msra.mxu0 0.0
        %1380 = vmatprep.subr.mxu0 0.0
        %1381 = vmatpush2.msra.mxu0 0.0
        %1382 = vmatprep.subr.mxu0 0.0
        %1383 = vmatpush2.msra.mxu0 0.0
        %1384 = vmatprep.subr.mxu0 0.0
        %1385 = vmatpush2.msra.mxu0 0.0
        %1386 = vmatprep.subr.mxu0 0.0
        %1387 = vmatpush2.msra.mxu0 0.0
        %1388 = vmatprep.subr.mxu0 0.0
        %1389 = vmatpush2.msra.mxu0 0.0
        %1390 = vmatprep.subr.mxu0 0.0
        %1391 = vmatpush2.msra.mxu0 0.0
        %1392 = vmatprep.subr.mxu0 0.0
        %1393 = vmatpush2.msra.mxu0 0.0
        %1394 = vmatprep.mubr.f32.mxu0 0.0
        %v1395 = vand.u32 %v1097, 4294901760
        %v1396 = vsub.f32 %v1097, %v1395
        %v1397 = vand.u32 %v1396, 4294901760
        %1398 = vmatmul.mubr.f32.gmra.mxu0 %v1397
        %v1399 = vpop.f32.mrf.mxu0
        %v1400 = vadd.f32 %v1326, %v1399
        %v1401 = vpop.f32.mrf.mxu0
        %1402 = vdwg.mxu0
        %1403 = vmatprep.subr.mxu0 0.0
        %1404 = vmatpush1.msra.mxu0 0.0
        %1405 = vmatprep.subr.mxu0 0.0
        %1406 = vmatpush1.msra.mxu0 0.0
        %1407 = vmatprep.subr.mxu0 0.0
        %1408 = vmatpush1.msra.mxu0 0.0
        %1409 = vmatprep.subr.mxu0 0.0
        %1410 = vmatpush1.msra.mxu0 0.0
        %1411 = vmatprep.subr.mxu0 0.0
        %1412 = vmatpush1.msra.mxu0 0.0
        %1413 = vmatprep.subr.mxu0 0.0
        %1414 = vmatpush1.msra.mxu0 0.0
        %1415 = vmatprep.subr.mxu0 0.0
        %1416 = vmatpush1.msra.mxu0 0.0
        %1417 = vmatprep.subr.mxu0 0.0
        %1418 = vmatpush1.msra.mxu0 0.0
        %1419 = vmatprep.subr.mxu0 0.0
        %1420 = vmatpush1.msra.mxu0 0.0
        %1421 = vmatprep.subr.mxu0 0.0
        %1422 = vmatpush1.msra.mxu0 0.0
        %1423 = vmatprep.subr.mxu0 0.0
        %1424 = vmatpush1.msra.mxu0 0.0
        %1425 = vmatprep.subr.mxu0 0.0
        %1426 = vmatpush1.msra.mxu0 0.0
        %1427 = vmatprep.subr.mxu0 0.0
        %1428 = vmatpush1.msra.mxu0 0.0
        %1429 = vmatprep.subr.mxu0 0.0
        %1430 = vmatpush1.msra.mxu0 0.0
        %1431 = vmatprep.subr.mxu0 0.0
        %1432 = vmatpush1.msra.mxu0 0.0
        %1433 = vmatprep.subr.mxu0 0.0
        %v1434 = vand.u32 %v1101, 4294901760
        %v1435 = vsub.f32 %v1101, %v1434
        %v1436 = vand.u32 %v1435, 4294901760
        %1437 = vmatpush1.msra.mxu0 %v1436
        %1438 = vmatprep.subr.mxu0 0.0
        %1439 = vmatpush2.msra.mxu0 0.0
        %1440 = vmatprep.subr.mxu0 0.0
        %1441 = vmatpush2.msra.mxu0 0.0
        %1442 = vmatprep.subr.mxu0 0.0
        %1443 = vmatpush2.msra.mxu0 0.0
        %1444 = vmatprep.subr.mxu0 0.0
        %1445 = vmatpush2.msra.mxu0 0.0
        %1446 = vmatprep.subr.mxu0 0.0
        %1447 = vmatpush2.msra.mxu0 0.0
        %1448 = vmatprep.subr.mxu0 0.0
        %1449 = vmatpush2.msra.mxu0 0.0
        %1450 = vmatprep.subr.mxu0 0.0
        %1451 = vmatpush2.msra.mxu0 0.0
        %1452 = vmatprep.subr.mxu0 0.0
        %1453 = vmatpush2.msra.mxu0 0.0
        %1454 = vmatprep.subr.mxu0 0.0
        %1455 = vmatpush2.msra.mxu0 0.0
        %1456 = vmatprep.subr.mxu0 0.0
        %1457 = vmatpush2.msra.mxu0 0.0
        %1458 = vmatprep.subr.mxu0 0.0
        %1459 = vmatpush2.msra.mxu0 0.0
        %1460 = vmatprep.subr.mxu0 0.0
        %1461 = vmatpush2.msra.mxu0 0.0
        %1462 = vmatprep.subr.mxu0 0.0
        %1463 = vmatpush2.msra.mxu0 0.0
        %1464 = vmatprep.subr.mxu0 0.0
        %1465 = vmatpush2.msra.mxu0 0.0
        %1466 = vmatprep.subr.mxu0 0.0
        %1467 = vmatpush2.msra.mxu0 0.0
        %1468 = vmatprep.subr.mxu0 0.0
        %1469 = vmatpush2.msra.mxu0 0.0
        %1470 = vmatprep.mubr.f32.mxu0 0.0
        %v1471 = vand.u32 %v1097, 4294901760
        %1472 = vmatmul.mubr.f32.gmra.mxu0 %v1471
        %v1473 = vpop.f32.mrf.mxu0
        %v1474 = vadd.f32 %v1400, %v1473
        %v1475 = vpop.f32.mrf.mxu0
        %1476 = vdwg.mxu0
        %1477 = vmatprep.subr.mxu0 0.0
        %1478 = vmatpush1.msra.mxu0 0.0
        %1479 = vmatprep.subr.mxu0 0.0
        %1480 = vmatpush1.msra.mxu0 0.0
        %1481 = vmatprep.subr.mxu0 0.0
        %1482 = vmatpush1.msra.mxu0 0.0
        %1483 = vmatprep.subr.mxu0 0.0
        %1484 = vmatpush1.msra.mxu0 0.0
        %1485 = vmatprep.subr.mxu0 0.0
        %1486 = vmatpush1.msra.mxu0 0.0
        %1487 = vmatprep.subr.mxu0 0.0
        %1488 = vmatpush1.msra.mxu0 0.0
        %1489 = vmatprep.subr.mxu0 0.0
        %1490 = vmatpush1.msra.mxu0 0.0
        %1491 = vmatprep.subr.mxu0 0.0
        %1492 = vmatpush1.msra.mxu0 0.0
        %1493 = vmatprep.subr.mxu0 0.0
        %1494 = vmatpush1.msra.mxu0 0.0
        %1495 = vmatprep.subr.mxu0 0.0
        %1496 = vmatpush1.msra.mxu0 0.0
        %1497 = vmatprep.subr.mxu0 0.0
        %1498 = vmatpush1.msra.mxu0 0.0
        %1499 = vmatprep.subr.mxu0 0.0
        %1500 = vmatpush1.msra.mxu0 0.0
        %1501 = vmatprep.subr.mxu0 0.0
        %1502 = vmatpush1.msra.mxu0 0.0
        %1503 = vmatprep.subr.mxu0 0.0
        %1504 = vmatpush1.msra.mxu0 0.0
        %1505 = vmatprep.subr.mxu0 0.0
        %1506 = vmatpush1.msra.mxu0 0.0
        %1507 = vmatprep.subr.mxu0 0.0
        %v1508 = vand.u32 %v1101, 4294901760
        %1509 = vmatpush1.msra.mxu0 %v1508
        %1510 = vmatprep.subr.mxu0 0.0
        %1511 = vmatpush2.msra.mxu0 0.0
        %1512 = vmatprep.subr.mxu0 0.0
        %1513 = vmatpush2.msra.mxu0 0.0
        %1514 = vmatprep.subr.mxu0 0.0
        %1515 = vmatpush2.msra.mxu0 0.0
        %1516 = vmatprep.subr.mxu0 0.0
        %1517 = vmatpush2.msra.mxu0 0.0
        %1518 = vmatprep.subr.mxu0 0.0
        %1519 = vmatpush2.msra.mxu0 0.0
        %1520 = vmatprep.subr.mxu0 0.0
        %1521 = vmatpush2.msra.mxu0 0.0
        %1522 = vmatprep.subr.mxu0 0.0
        %1523 = vmatpush2.msra.mxu0 0.0
        %1524 = vmatprep.subr.mxu0 0.0
        %1525 = vmatpush2.msra.mxu0 0.0
        %1526 = vmatprep.subr.mxu0 0.0
        %1527 = vmatpush2.msra.mxu0 0.0
        %1528 = vmatprep.subr.mxu0 0.0
        %1529 = vmatpush2.msra.mxu0 0.0
        %1530 = vmatprep.subr.mxu0 0.0
        %1531 = vmatpush2.msra.mxu0 0.0
        %1532 = vmatprep.subr.mxu0 0.0
        %1533 = vmatpush2.msra.mxu0 0.0
        %1534 = vmatprep.subr.mxu0 0.0
        %1535 = vmatpush2.msra.mxu0 0.0
        %1536 = vmatprep.subr.mxu0 0.0
        %1537 = vmatpush2.msra.mxu0 0.0
        %1538 = vmatprep.subr.mxu0 0.0
        %1539 = vmatpush2.msra.mxu0 0.0
        %1540 = vmatprep.subr.mxu0 0.0
        %1541 = vmatpush2.msra.mxu0 0.0
        %1542 = vmatprep.mubr.f32.mxu0 0.0
        %v1543 = vand.u32 %v1097, 4294901760
        %1544 = vmatmul.mubr.f32.gmra.mxu0 %v1543
        %v1545 = vpop.f32.mrf.mxu0
        %v1546 = vadd.f32 %v1474, %v1545
        %v1547 = vpop.f32.mrf.mxu0
        %1548 = vdwg.mxu0
        %v1549 = vxor.u32 %v1546, 2147483648
        %v1550 = vmul.f32 %v1549, 1.442695
        %v1551 = vpow.pop %v1550
        %v1552 = vadd.f32 %v1551, 1.0
        %v1553 = vrcp.pop %v1552
        %v1554 = vmul.f32 1.0, %v1553
        %1556 = vset.pattern.permute.xlu0 0
        %1557 = vperm.xlu0 %1556, %v1554
        %v1558 = vpop.permute.xlu0 %1557
        %v1560 = vunpack.c.l.s4 839922192
        %v1561 = vunpack.c.0.s8 %v1560
        %v1562 = vlaneseq
        %v1563 = vshrl.u32 %v1562, 7
        %v1564 = vsub.s32 %v1561, %v1563
        %v1565 = vrot.slane %v1558, %v1564
        %v1567 = vmul.f32 %v187, %v1565
        %1568 = vst [vmem:[%s186] sm:$0xff] %v1567
        %s1569 = sand.u32 %s96, 1
        %s1570 = scalar_lea.sflag [#allocation4], %s1569
        %s1571 = sand.u32 %s96, 1
        %s1572 = smul.addr %s1571, 8
        %s1573 = scalar_lea.vmem [#allocation5], %s1572
        // Predicated region
        $region37: #{tpu_custom_call.1} parent=31 // pred_check
          %p1574 = pneg %p106
        $region38: #{tpu_custom_call.1} parent=31 // pred_check_branch
          %1576 = sbr.rel (%p1574) target = $region40
        $region39: #{tpu_custom_call.1} parent=31 // pred_region
          %s1578 = ssub.s32 128, 128
          %1579 = vsyncadd %s1570, %s1578
          %s1580 = smul.addr %s20, 2
          %s1581 = smul.addr %s1580, 64
          %s1582 = scalar_lea.hbm %s3, %s1581
          %s1584 = sshll.u32 %s1573, 4
          %s1585 = int_to_ptr.vmem [resolvable:$true] %s1584
          %1587 = dma.vmem_to_hbm [thread:$0]  %s1585, 128, %s1582, %s1570
        $region40: #{tpu_custom_call.1} parent=31 // pred_fallthru
          _
      $region32: #{tpu_custom_call.1} parent=5 // pred_fallthru
        _
      %p1588 = scmp.le.s32.totalorder 2, %s15
      // Predicated region
      $region41: #{tpu_custom_call.1} parent=5 // pred_check
        %p1589 = pneg %p1588
      $region42: #{tpu_custom_call.1} parent=5 // pred_check_branch
        %1591 = sbr.rel (%p1589) target = $region44
      $region43: #{tpu_custom_call.1} parent=5 // pred_region
        %s1592 = ssub.s32 %s15, 2
        // Predicated region
        $region45: #{tpu_custom_call.1} parent=43 // pred_check
          %p1593 = pneg %p112
        $region46: #{tpu_custom_call.1} parent=43 // pred_check_branch
          %1595 = sbr.rel (%p1593) target = $region48
        $region47: #{tpu_custom_call.1} parent=43 // pred_region
          %s1596 = sand.u32 %s97, 1
          %s1597 = scalar_lea.sflag [#allocation4], %s1596
          %s1598 = sand.u32 %s97, 1
          %s1599 = smul.addr %s1598, 8
          %s1600 = scalar_lea.vmem [#allocation5], %s1599
          %1601 = dma.done %s1597, 128
        $region48: #{tpu_custom_call.1} parent=43 // pred_fallthru
          _
      $region44: #{tpu_custom_call.1} parent=5 // pred_fallthru
        _
    $region6: #{tpu_custom_call.1} parent=1 // loop_footer
      %s19 = sadd.s32 1, %s15
    $region7: #{tpu_custom_call.1} parent=1 // loop_footer_branch
      %14 = sbr.rel target = $region3
    $region8: #{tpu_custom_call.1} parent=1 // loop_exit
      _
    %1602 = vsyncpa [#allocation3], 1
    %s1603 = scalar_lea.sflag [#allocation3], 1
    %1604 = vsyncpa %s1603, 1
    %1605 = vsyncpa [#allocation4], 1
    %s1606 = scalar_lea.sflag [#allocation4], 1
    %1607 = vsyncpa %s1606, 1

</llo_original>
